<compile_context>
chip_gen: v7x
topology: tpu7x:2x2x1
jax: 0.10.0
libtpu: 0.0.40
codegen_flags: <defaults>
</compile_context>

<pallas_src>
import jax
import jax.numpy as jnp
from jax import lax
from jax.experimental import pallas as pl
from jax.experimental.pallas import tpu as pltpu


_DEFAULT_TILE_CAP = 256  # sweep 256-512 per perf review; v7x may prefer 128-256


def _pick_tile(n: int, cap: int = _DEFAULT_TILE_CAP) -> int:
    """Tile size: `cap` for large n, otherwise n rounded up to a sublane multiple."""
    if n >= cap:
        return cap
    return max(8, ((n + 7) // 8) * 8)


def _make_instance_loss_kernel(TM, TK, batch, temperature, mask_tail_cols,
                               precision):
    # Plain Python floats => jaxpr literals, nothing closure-captured as f32[].
    inv_t = 1.0 / float(temperature)
    neg_big = -1e30  # finite "minus infinity": exp(neg_big - m) == 0 exactly

    def kernel(zi_r_ref, zj_r_ref, zi_c_ref, zj_c_ref,
               loss_i_ref, loss_j_ref, m_i, l_i, m_j, l_j):
        i = pl.program_id(0)
        kj = pl.program_id(1)

        @pl.when(kj == 0)
        def _():
            m_i[...] = jnp.full_like(m_i, -jnp.inf)
            l_i[...] = jnp.zeros_like(l_i)
            m_j[...] = jnp.full_like(m_j, -jnp.inf)
            l_j[...] = jnp.zeros_like(l_j)

        ci = zi_c_ref[...]          # (TK, D) "columns" drawn from z_i
        cj = zj_c_ref[...]          # (TK, D) "columns" drawn from z_j
        mm_dtype = ci.dtype         # bf16 when streaming bf16 columns, else f32

        # Self-similarity mask; it can only hit the same-half tiles
        # (z_i rows vs z_i cols, z_j rows vs z_j cols).
        r_glob = lax.broadcasted_iota(jnp.int32, (TM, TK), 0) + i * TM
        c_glob = lax.broadcasted_iota(jnp.int32, (TM, TK), 1) + kj * TK
        self_mask = r_glob == c_glob
        if mask_tail_cols:          # static (trace-time) decision
            col_bad = c_glob >= batch
            self_mask = self_mask | col_bad

        dn = (((1,), (1,)), ((), ()))   # contract hidden dim of both operands

        def half_update(rows, m_ref, l_ref, self_is_ci):
            """Online-logsumexp update for one half (rows vs [z_i | z_j] cols)."""
            rows_mm = rows.astype(mm_dtype)
            c_self = ci if self_is_ci else cj
            c_other = cj if self_is_ci else ci
            s_self = lax.dot_general(
                rows_mm, c_self, dn, precision=precision,
                preferred_element_type=jnp.float32) * inv_t
            s_other = lax.dot_general(
                rows_mm, c_other, dn, precision=precision,
                preferred_element_type=jnp.float32) * inv_t
            s_self = jnp.where(self_mask, neg_big, s_self)
            if mask_tail_cols:
                s_other = jnp.where(col_bad, neg_big, s_other)

            m_prev = m_ref[...]
            # Elementwise max of the two tiles first => one cross-lane row-max
            # instead of two (halves the XLU reduction count).
            m_new = jnp.maximum(
                m_prev,
                jnp.max(jnp.maximum(s_self, s_other), axis=1, keepdims=True))
            # TODO(synk): on v6e/v7x a bf16 exp (EUP bf16 path) ~doubles exp
            # throughput at a small accuracy cost; kept f32 for exactness.
            p = jnp.exp(s_self - m_new) + jnp.exp(s_other - m_new)
            l_ref[...] = (jnp.exp(m_prev - m_new) * l_ref[...]
                          + jnp.sum(p, axis=1, keepdims=True))
            m_ref[...] = m_new

        # Interleaved: the second half's matmuls are emitted only after the
        # first half's (TM, TK) tiles have been consumed (shorter live range).
        half_update(zi_r_ref[...], m_i, l_i, self_is_ci=True)
        half_update(zj_r_ref[...], m_j, l_j, self_is_ci=False)

        @pl.when(kj == pl.num_programs(1) - 1)
        def _():
            # Positive pair in O(TM*D): row r of z_i and row r of z_j are each
            # other's partners; <z_i[r], z_j[r]>/T serves both halves (kept f32).
            a = zi_r_ref[...].astype(jnp.float32)
            b = zj_r_ref[...].astype(jnp.float32)
            pos = jnp.sum(a * b, axis=-1, keepdims=True) * inv_t
            loss_i_ref[...] = (m_i[...] + jnp.log(l_i[...])) - pos
            loss_j_ref[...] = (m_j[...] + jnp.log(l_j[...])) - pos

    return kernel


def instance_loss(z_i, z_j, temperature, *,
                  tile_m=None, tile_k=None,
                  use_bf16_cols=False,
                  precision=lax.Precision.HIGHEST,
                  vmem_limit_bytes=64 * 1024 * 1024):
    """Pallas implementation of InstanceLoss.forward.  Returns a scalar."""
    batch, hidden = z_i.shape
    assert z_j.shape == (batch, hidden)

    TM = tile_m if tile_m is not None else _pick_tile(batch)
    TK = tile_k if tile_k is not None else _pick_tile(batch)
    n_row = pl.cdiv(batch, TM)
    n_col = pl.cdiv(batch, TK)
    mask_tail_cols = (batch % TK) != 0

    # Column-role operands are re-streamed n_row times; optionally halve their
    # HBM/VMEM footprint and take the native bf16 MXU path (rows stay f32 for
    # the positive-pair term).
    zi_c = z_i.astype(jnp.bfloat16) if use_bf16_cols else z_i
    zj_c = z_j.astype(jnp.bfloat16) if use_bf16_cols else z_j

    kernel = _make_instance_loss_kernel(TM, TK, batch, temperature,
                                        mask_tail_cols, precision)

    # TODO(synk): hidden is kept as one full-extent block; very large hidden
    # dims would need an inner K-tiled accumulation.
    loss_i_rows, loss_j_rows = pl.pallas_call(
        kernel,
        grid=(n_row, n_col),
        in_specs=[
            pl.BlockSpec((TM, hidden), lambda i, k: (i, 0)),   # z_i row tiles
            pl.BlockSpec((TM, hidden), lambda i, k: (i, 0)),   # z_j row tiles
            pl.BlockSpec((TK, hidden), lambda i, k: (k, 0)),   # z_i col tiles
            pl.BlockSpec((TK, hidden), lambda i, k: (k, 0)),   # z_j col tiles
        ],
        out_specs=(
            pl.BlockSpec((TM, 1), lambda i, k: (i, 0)),
            pl.BlockSpec((TM, 1), lambda i, k: (i, 0)),
        ),
        out_shape=(
            jax.ShapeDtypeStruct((batch, 1), jnp.float32),
            jax.ShapeDtypeStruct((batch, 1), jnp.float32),
        ),
        scratch_shapes=[pltpu.VMEM((TM, 1), jnp.float32)] * 4,
        compiler_params=pltpu.CompilerParams(
            dimension_semantics=("parallel", "arbitrary"),
            # TODO(synk): sweep per generation; v7x (64 MiB physical VMEM)
            # prefers a smaller budget and/or bf16 columns to keep
            # double-buffering at 256-wide tiles.
            vmem_limit_bytes=vmem_limit_bytes),
    )(z_i, z_j, zi_c, zj_c)

    return (jnp.sum(loss_i_rows) + jnp.sum(loss_j_rows)) / (2.0 * batch)


def _reference_instance_loss(z_i, z_j, temperature):
    """Pure-JAX reference mirroring the PyTorch module (for a silent check)."""
    batch = z_i.shape[0]
    N = 2 * batch
    z = jnp.concatenate([z_i, z_j], axis=0)
    sim = jnp.matmul(z, z.T, precision=lax.Precision.HIGHEST) / temperature
    idx = jnp.arange(N)
    pos = sim[idx, (idx + batch) % N]
    sim_masked = jnp.where(jnp.eye(N, dtype=bool), -jnp.inf, sim)
    lse = jax.scipy.special.logsumexp(sim_masked, axis=1)
    return jnp.sum(lse - pos) / N


if __name__ == "__main__":
    batch_size = 8
    hidden = 32
    temperature = 0.5

    key = jax.random.PRNGKey(0)
    k1, k2 = jax.random.split(key)
    z_i = jax.random.normal(k1, (batch_size, hidden), dtype=jnp.float32)
    z_j = jax.random.normal(k2, (batch_size, hidden), dtype=jnp.float32)

    loss = instance_loss(z_i, z_j, temperature)
    jax.block_until_ready(loss)

    ref = _reference_instance_loss(z_i, z_j, temperature)
    # Modest tolerance: online-LSE vs scipy logsumexp + summation-order
    # differences in f32; a masking/positive-pair bug would be off by O(1).
    assert jnp.allclose(loss, ref, rtol=1e-4, atol=1e-4), (loss, ref)

    print("KERNEL_OK")
</pallas_src>

<mosaic_0001>
module attributes {stable_mosaic.version = 11 : i64} {
  func.func @kernel(%arg0: i32, %arg1: i32, %arg2: memref<8x32xf32, #tpu.memory_space<vmem>>, %arg3: memref<8x32xf32, #tpu.memory_space<vmem>>, %arg4: memref<8x32xf32, #tpu.memory_space<vmem>>, %arg5: memref<8x32xf32, #tpu.memory_space<vmem>>, %arg6: memref<8x1xf32, #tpu.memory_space<vmem>>, %arg7: memref<8x1xf32, #tpu.memory_space<vmem>>, %arg8: memref<8x1xf32, #tpu.memory_space<vmem>>, %arg9: memref<8x1xf32, #tpu.memory_space<vmem>>, %arg10: memref<8x1xf32, #tpu.memory_space<vmem>>, %arg11: memref<8x1xf32, #tpu.memory_space<vmem>>) attributes {dimension_semantics = [#tpu.dimension_semantics<parallel>, #tpu.dimension_semantics<arbitrary>], iteration_bounds = array<i64: 1, 1>, scalar_prefetch = 0 : i64, scratch_operands = 4 : i64, tpu.core_type = #tpu.core_type<tc>, window_params = [{transform_indices = @transform_0, window_bounds = array<i64: 8, 32>}, {transform_indices = @transform_1, window_bounds = array<i64: 8, 32>}, {transform_indices = @transform_2, window_bounds = array<i64: 8, 32>}, {transform_indices = @transform_3, window_bounds = array<i64: 8, 32>}, {transform_indices = @transform_4, window_bounds = array<i64: 8, 1>}, {transform_indices = @transform_5, window_bounds = array<i64: 8, 1>}]} {
    %c0_i32 = arith.constant 0 : i32
    %0 = arith.cmpi eq, %arg1, %c0_i32 : i32
    %1 = arith.extui %0 : i1 to i32
    %c0_i32_0 = arith.constant 0 : i32
    %2 = arith.cmpi ne, %1, %c0_i32_0 : i32
    scf.if %2 {
      %cst_40 = arith.constant 0xFF800000 : f32
      %77 = vector.broadcast %cst_40 : f32 to vector<8x1xf32>
      %c0_41 = arith.constant 0 : index
      %c0_42 = arith.constant 0 : index
      %78 = vector.load %arg8[%c0_41, %c0_42] : memref<8x1xf32, #tpu.memory_space<vmem>>, vector<8x1xf32>
      tpu.vector_store %arg8[%c0_41, %c0_42], %77 {strides = array<i32>} : memref<8x1xf32, #tpu.memory_space<vmem>>, vector<8x1xf32>,
      %cst_43 = arith.constant 0.000000e+00 : f32
      %79 = vector.broadcast %cst_43 : f32 to vector<8x1xf32>
      %c0_44 = arith.constant 0 : index
      %c0_45 = arith.constant 0 : index
      %80 = vector.load %arg9[%c0_44, %c0_45] : memref<8x1xf32, #tpu.memory_space<vmem>>, vector<8x1xf32>
      tpu.vector_store %arg9[%c0_44, %c0_45], %79 {strides = array<i32>} : memref<8x1xf32, #tpu.memory_space<vmem>>, vector<8x1xf32>,
      %cst_46 = arith.constant 0xFF800000 : f32
      %81 = vector.broadcast %cst_46 : f32 to vector<8x1xf32>
      %c0_47 = arith.constant 0 : index
      %c0_48 = arith.constant 0 : index
      %82 = vector.load %arg10[%c0_47, %c0_48] : memref<8x1xf32, #tpu.memory_space<vmem>>, vector<8x1xf32>
      tpu.vector_store %arg10[%c0_47, %c0_48], %81 {strides = array<i32>} : memref<8x1xf32, #tpu.memory_space<vmem>>, vector<8x1xf32>,
      %cst_49 = arith.constant 0.000000e+00 : f32
      %83 = vector.broadcast %cst_49 : f32 to vector<8x1xf32>
      %c0_50 = arith.constant 0 : index
      %c0_51 = arith.constant 0 : index
      %84 = vector.load %arg11[%c0_50, %c0_51] : memref<8x1xf32, #tpu.memory_space<vmem>>, vector<8x1xf32>
      tpu.vector_store %arg11[%c0_50, %c0_51], %83 {strides = array<i32>} : memref<8x1xf32, #tpu.memory_space<vmem>>, vector<8x1xf32>,
    } else {
    }
    %c0 = arith.constant 0 : index
    %c0_1 = arith.constant 0 : index
    %3 = vector.load %arg4[%c0, %c0_1] : memref<8x32xf32, #tpu.memory_space<vmem>>, vector<8x32xf32>
    %c0_2 = arith.constant 0 : index
    %c0_3 = arith.constant 0 : index
    %4 = vector.load %arg5[%c0_2, %c0_3] : memref<8x32xf32, #tpu.memory_space<vmem>>, vector<8x32xf32>
    %5 = tpu.iota {dimensions = array<i32: 0>} : vector<8x8xi32>
    %c8_i32 = arith.constant 8 : i32
    %6 = arith.muli %arg0, %c8_i32 : i32
    %7 = vector.broadcast %6 : i32 to vector<8x8xi32>
    %8 = arith.addi %5, %7 : vector<8x8xi32>
    %9 = tpu.iota {dimensions = array<i32: 1>} : vector<8x8xi32>
    %c8_i32_4 = arith.constant 8 : i32
    %10 = arith.muli %arg1, %c8_i32_4 : i32
    %11 = vector.broadcast %10 : i32 to vector<8x8xi32>
    %12 = arith.addi %9, %11 : vector<8x8xi32>
    %13 = arith.cmpi eq, %8, %12 : vector<8x8xi32>
    %c0_5 = arith.constant 0 : index
    %c0_6 = arith.constant 0 : index
    %14 = vector.load %arg2[%c0_5, %c0_6] : memref<8x32xf32, #tpu.memory_space<vmem>>, vector<8x32xf32>
    %cst = arith.constant dense<0.000000e+00> : vector<8x8xf32>
    %15 = tpu.matmul %14, %3, %cst {dimension_numbers = #tpu.dot_dimension_numbers<[1], [1], [0], [0], [0, 0, 1, 0], [], []>, precision = #tpu.contract_precision<fp32>} : vector<8x32xf32>, vector<8x32xf32>, vector<8x8xf32> -> vector<8x8xf32>
    %cst_7 = arith.constant 2.000000e+00 : f32
    %16 = vector.broadcast %cst_7 : f32 to vector<8x8xf32>
    %17 = arith.mulf %15, %16 : vector<8x8xf32>
    %cst_8 = arith.constant dense<0.000000e+00> : vector<8x8xf32>
    %18 = tpu.matmul %14, %4, %cst_8 {dimension_numbers = #tpu.dot_dimension_numbers<[1], [1], [0], [0], [0, 0, 1, 0], [], []>, precision = #tpu.contract_precision<fp32>} : vector<8x32xf32>, vector<8x32xf32>, vector<8x8xf32> -> vector<8x8xf32>
    %cst_9 = arith.constant 2.000000e+00 : f32
    %19 = vector.broadcast %cst_9 : f32 to vector<8x8xf32>
    %20 = arith.mulf %18, %19 : vector<8x8xf32>
    %cst_10 = arith.constant -1.000000e+30 : f32
    %21 = vector.broadcast %cst_10 : f32 to vector<8x8xf32>
    %22 = arith.select %13, %21, %17 : vector<8x8xi1>, vector<8x8xf32>
    %c0_11 = arith.constant 0 : index
    %c0_12 = arith.constant 0 : index
    %23 = vector.load %arg8[%c0_11, %c0_12] : memref<8x1xf32, #tpu.memory_space<vmem>>, vector<8x1xf32>
    %24 = arith.maximumf %22, %20 : vector<8x8xf32>
    %cst_13 = arith.constant dense<0xFF800000> : vector<8xf32>
    %25 = vector.multi_reduction <maximumf>, %24, %cst_13 [1] : vector<8x8xf32> to vector<8xf32>
    %26 = vector.shape_cast %25 : vector<8xf32> to vector<8x1xf32>
    %27 = arith.maximumf %23, %26 : vector<8x1xf32>
    %28 = vector.broadcast %27 : vector<8x1xf32> to vector<8x8xf32>
    %29 = arith.subf %22, %28 : vector<8x8xf32>
    %30 = math.exp %29 : vector<8x8xf32>
    %31 = vector.broadcast %27 : vector<8x1xf32> to vector<8x8xf32>
    %32 = arith.subf %20, %31 : vector<8x8xf32>
    %33 = math.exp %32 : vector<8x8xf32>
    %34 = arith.addf %30, %33 : vector<8x8xf32>
    %35 = arith.subf %23, %27 : vector<8x1xf32>
    %36 = math.exp %35 : vector<8x1xf32>
    %c0_14 = arith.constant 0 : index
    %c0_15 = arith.constant 0 : index
    %37 = vector.load %arg9[%c0_14, %c0_15] : memref<8x1xf32, #tpu.memory_space<vmem>>, vector<8x1xf32>
    %38 = arith.mulf %36, %37 : vector<8x1xf32>
    %cst_16 = arith.constant dense<0.000000e+00> : vector<8xf32>
    %39 = vector.multi_reduction <add>, %34, %cst_16 [1] : vector<8x8xf32> to vector<8xf32>
    %40 = vector.shape_cast %39 : vector<8xf32> to vector<8x1xf32>
    %41 = arith.addf %38, %40 : vector<8x1xf32>
    %c0_17 = arith.constant 0 : index
    %c0_18 = arith.constant 0 : index
    %42 = vector.load %arg9[%c0_17, %c0_18] : memref<8x1xf32, #tpu.memory_space<vmem>>, vector<8x1xf32>
    tpu.vector_store %arg9[%c0_17, %c0_18], %41 {strides = array<i32>} : memref<8x1xf32, #tpu.memory_space<vmem>>, vector<8x1xf32>,
    %c0_19 = arith.constant 0 : index
    %c0_20 = arith.constant 0 : index
    %43 = vector.load %arg8[%c0_19, %c0_20] : memref<8x1xf32, #tpu.memory_space<vmem>>, vector<8x1xf32>
    tpu.vector_store %arg8[%c0_19, %c0_20], %27 {strides = array<i32>} : memref<8x1xf32, #tpu.memory_space<vmem>>, vector<8x1xf32>,
    %c0_21 = arith.constant 0 : index
    %c0_22 = arith.constant 0 : index
    %44 = vector.load %arg3[%c0_21, %c0_22] : memref<8x32xf32, #tpu.memory_space<vmem>>, vector<8x32xf32>
    %cst_23 = arith.constant dense<0.000000e+00> : vector<8x8xf32>
    %45 = tpu.matmul %44, %4, %cst_23 {dimension_numbers = #tpu.dot_dimension_numbers<[1], [1], [0], [0], [0, 0, 1, 0], [], []>, precision = #tpu.contract_precision<fp32>} : vector<8x32xf32>, vector<8x32xf32>, vector<8x8xf32> -> vector<8x8xf32>
    %cst_24 = arith.constant 2.000000e+00 : f32
    %46 = vector.broadcast %cst_24 : f32 to vector<8x8xf32>
    %47 = arith.mulf %45, %46 : vector<8x8xf32>
    %cst_25 = arith.constant dense<0.000000e+00> : vector<8x8xf32>
    %48 = tpu.matmul %44, %3, %cst_25 {dimension_numbers = #tpu.dot_dimension_numbers<[1], [1], [0], [0], [0, 0, 1, 0], [], []>, precision = #tpu.contract_precision<fp32>} : vector<8x32xf32>, vector<8x32xf32>, vector<8x8xf32> -> vector<8x8xf32>
    %cst_26 = arith.constant 2.000000e+00 : f32
    %49 = vector.broadcast %cst_26 : f32 to vector<8x8xf32>
    %50 = arith.mulf %48, %49 : vector<8x8xf32>
    %cst_27 = arith.constant -1.000000e+30 : f32
    %51 = vector.broadcast %cst_27 : f32 to vector<8x8xf32>
    %52 = arith.select %13, %51, %47 : vector<8x8xi1>, vector<8x8xf32>
    %c0_28 = arith.constant 0 : index
    %c0_29 = arith.constant 0 : index
    %53 = vector.load %arg10[%c0_28, %c0_29] : memref<8x1xf32, #tpu.memory_space<vmem>>, vector<8x1xf32>
    %54 = arith.maximumf %52, %50 : vector<8x8xf32>
    %cst_30 = arith.constant dense<0xFF800000> : vector<8xf32>
    %55 = vector.multi_reduction <maximumf>, %54, %cst_30 [1] : vector<8x8xf32> to vector<8xf32>
    %56 = vector.shape_cast %55 : vector<8xf32> to vector<8x1xf32>
    %57 = arith.maximumf %53, %56 : vector<8x1xf32>
    %58 = vector.broadcast %57 : vector<8x1xf32> to vector<8x8xf32>
    %59 = arith.subf %52, %58 : vector<8x8xf32>
    %60 = math.exp %59 : vector<8x8xf32>
    %61 = vector.broadcast %57 : vector<8x1xf32> to vector<8x8xf32>
    %62 = arith.subf %50, %61 : vector<8x8xf32>
    %63 = math.exp %62 : vector<8x8xf32>
    %64 = arith.addf %60, %63 : vector<8x8xf32>
    %65 = arith.subf %53, %57 : vector<8x1xf32>
    %66 = math.exp %65 : vector<8x1xf32>
    %c0_31 = arith.constant 0 : index
    %c0_32 = arith.constant 0 : index
    %67 = vector.load %arg11[%c0_31, %c0_32] : memref<8x1xf32, #tpu.memory_space<vmem>>, vector<8x1xf32>
    %68 = arith.mulf %66, %67 : vector<8x1xf32>
    %cst_33 = arith.constant dense<0.000000e+00> : vector<8xf32>
    %69 = vector.multi_reduction <add>, %64, %cst_33 [1] : vector<8x8xf32> to vector<8xf32>
    %70 = vector.shape_cast %69 : vector<8xf32> to vector<8x1xf32>
    %71 = arith.addf %68, %70 : vector<8x1xf32>
    %c0_34 = arith.constant 0 : index
    %c0_35 = arith.constant 0 : index
    %72 = vector.load %arg11[%c0_34, %c0_35] : memref<8x1xf32, #tpu.memory_space<vmem>>, vector<8x1xf32>
    tpu.vector_store %arg11[%c0_34, %c0_35], %71 {strides = array<i32>} : memref<8x1xf32, #tpu.memory_space<vmem>>, vector<8x1xf32>,
    %c0_36 = arith.constant 0 : index
    %c0_37 = arith.constant 0 : index
    %73 = vector.load %arg10[%c0_36, %c0_37] : memref<8x1xf32, #tpu.memory_space<vmem>>, vector<8x1xf32>
    tpu.vector_store %arg10[%c0_36, %c0_37], %57 {strides = array<i32>} : memref<8x1xf32, #tpu.memory_space<vmem>>, vector<8x1xf32>,
    %c0_i32_38 = arith.constant 0 : i32
    %74 = arith.cmpi eq, %arg1, %c0_i32_38 : i32
    %75 = arith.extui %74 : i1 to i32
    %c0_i32_39 = arith.constant 0 : i32
    %76 = arith.cmpi ne, %75, %c0_i32_39 : i32
    scf.if %76 {
      %c0_40 = arith.constant 0 : index
      %c0_41 = arith.constant 0 : index
      %77 = vector.load %arg2[%c0_40, %c0_41] : memref<8x32xf32, #tpu.memory_space<vmem>>, vector<8x32xf32>
      %c0_42 = arith.constant 0 : index
      %c0_43 = arith.constant 0 : index
      %78 = vector.load %arg3[%c0_42, %c0_43] : memref<8x32xf32, #tpu.memory_space<vmem>>, vector<8x32xf32>
      %79 = arith.mulf %77, %78 : vector<8x32xf32>
      %cst_44 = arith.constant dense<0.000000e+00> : vector<8xf32>
      %80 = vector.multi_reduction <add>, %79, %cst_44 [1] : vector<8x32xf32> to vector<8xf32>
      %81 = vector.shape_cast %80 : vector<8xf32> to vector<8x1xf32>
      %cst_45 = arith.constant 2.000000e+00 : f32
      %82 = vector.broadcast %cst_45 : f32 to vector<8x1xf32>
      %83 = arith.mulf %81, %82 : vector<8x1xf32>
      %c0_46 = arith.constant 0 : index
      %c0_47 = arith.constant 0 : index
      %84 = vector.load %arg8[%c0_46, %c0_47] : memref<8x1xf32, #tpu.memory_space<vmem>>, vector<8x1xf32>
      %c0_48 = arith.constant 0 : index
      %c0_49 = arith.constant 0 : index
      %85 = vector.load %arg9[%c0_48, %c0_49] : memref<8x1xf32, #tpu.memory_space<vmem>>, vector<8x1xf32>
      %86 = math.log %85 : vector<8x1xf32>
      %87 = arith.addf %84, %86 : vector<8x1xf32>
      %88 = arith.subf %87, %83 : vector<8x1xf32>
      %c0_50 = arith.constant 0 : index
      %c0_51 = arith.constant 0 : index
      %89 = vector.load %arg6[%c0_50, %c0_51] : memref<8x1xf32, #tpu.memory_space<vmem>>, vector<8x1xf32>
      tpu.vector_store %arg6[%c0_50, %c0_51], %88 {strides = array<i32>} : memref<8x1xf32, #tpu.memory_space<vmem>>, vector<8x1xf32>,
      %c0_52 = arith.constant 0 : index
      %c0_53 = arith.constant 0 : index
      %90 = vector.load %arg10[%c0_52, %c0_53] : memref<8x1xf32, #tpu.memory_space<vmem>>, vector<8x1xf32>
      %c0_54 = arith.constant 0 : index
      %c0_55 = arith.constant 0 : index
      %91 = vector.load %arg11[%c0_54, %c0_55] : memref<8x1xf32, #tpu.memory_space<vmem>>, vector<8x1xf32>
      %92 = math.log %91 : vector<8x1xf32>
      %93 = arith.addf %90, %92 : vector<8x1xf32>
      %94 = arith.subf %93, %83 : vector<8x1xf32>
      %c0_56 = arith.constant 0 : index
      %c0_57 = arith.constant 0 : index
      %95 = vector.load %arg7[%c0_56, %c0_57] : memref<8x1xf32, #tpu.memory_space<vmem>>, vector<8x1xf32>
      tpu.vector_store %arg7[%c0_56, %c0_57], %94 {strides = array<i32>} : memref<8x1xf32, #tpu.memory_space<vmem>>, vector<8x1xf32>,
    } else {
    }
    return
  }
  func.func @transform_0(%arg0: i32, %arg1: i32) -> (i32, i32) {
    %c0_i32 = arith.constant 0 : i32
    %c0_i32_0 = arith.constant 0 : i32
    return %arg0, %c0_i32 : i32, i32
  }
  func.func @transform_1(%arg0: i32, %arg1: i32) -> (i32, i32) {
    %c0_i32 = arith.constant 0 : i32
    %c0_i32_0 = arith.constant 0 : i32
    return %arg0, %c0_i32 : i32, i32
  }
  func.func @transform_2(%arg0: i32, %arg1: i32) -> (i32, i32) {
    %c0_i32 = arith.constant 0 : i32
    %c0_i32_0 = arith.constant 0 : i32
    return %arg1, %c0_i32 : i32, i32
  }
  func.func @transform_3(%arg0: i32, %arg1: i32) -> (i32, i32) {
    %c0_i32 = arith.constant 0 : i32
    %c0_i32_0 = arith.constant 0 : i32
    return %arg1, %c0_i32 : i32, i32
  }
  func.func @transform_4(%arg0: i32, %arg1: i32) -> (i32, i32) {
    %c0_i32 = arith.constant 0 : i32
    %c0_i32_0 = arith.constant 0 : i32
    return %arg0, %c0_i32 : i32, i32
  }
  func.func @transform_5(%arg0: i32, %arg1: i32) -> (i32, i32) {
    %c0_i32 = arith.constant 0 : i32
    %c0_i32_0 = arith.constant 0 : i32
    return %arg0, %c0_i32 : i32, i32
  }
}

</mosaic_0001>

<llo_original>
// kernel: tpu_custom_call.1
$region0: #{tpu_custom_call.1}
  #allocation0 [shape = 'u32[]', space=smem, size = 0x4, offset = 0x4, fixed_abs, tag = 'smem constant byte address 0x4 - core index']
  #allocation1 [shape = 'u32[144,128]{1,0:T(1,128)}', space=vmem, size = 0x12000, scoped, tag = 'internal scratch']
  #allocation2 [shape = 'f32[8,1]{1,0:T(8,128)}', space=vmem, size = 0x1000, scoped, tag = 'scratch operand']
  #allocation3 [shape = 'f32[8,1]{1,0:T(8,128)}', space=vmem, size = 0x1000, scoped, tag = 'scratch operand']
  #allocation4 [shape = 'f32[8,1]{1,0:T(8,128)}', space=vmem, size = 0x1000, scoped, tag = 'scratch operand']
  #allocation5 [shape = 'f32[8,1]{1,0:T(8,128)}', space=vmem, size = 0x1000, scoped, tag = 'scratch operand']
  %s0 = inlined_call_operand.hbm [shape: f32[8,32], index: 0, kind: input, shape index: {}]
  %s1 = inlined_call_operand.hbm [shape: f32[8,32], index: 1, kind: input, shape index: {}]
  %s2 = inlined_call_operand.hbm [shape: f32[8,32], index: 2, kind: input, shape index: {}]
  %s3 = inlined_call_operand.hbm [shape: f32[8,32], index: 3, kind: input, shape index: {}]
  %s4 = inlined_call_operand.hbm [shape: f32[8,1], index: 4, kind: output, shape index: {0}]
  %s5 = inlined_call_operand.hbm [shape: f32[8,1], index: 5, kind: output, shape index: {1}]
  %6 = xla_tuple %s4, %s5
  %s7 = sld [smem:[#allocation0]]
  $region58: #{tpu_custom_call.1} parent=0
    _
  %s9 = ssub.s32 1, %s7
  %s10 = scalar_select 0, %s9, %s7
  $region1: #{tpu_custom_call.1} parent=0
    #allocation6 [shape = 'u8[4096]{0}', space=vmem, size = 0x1000, scoped, tag = 'input window, operand 0, single buffered']
    #allocation7 [shape = 's32[1]{0}', space=sflag, size = 0x4, scoped, tag = 'scoped memory for tpu_custom_call.1']
    #allocation8 [shape = 's32[1]{0}', space=sflag, size = 0x4, scoped, tag = 'scoped memory for tpu_custom_call.1']
    #allocation9 [shape = 'u8[4096]{0}', space=vmem, size = 0x1000, scoped, tag = 'input window, operand 1, single buffered']
    #allocation10 [shape = 's32[1]{0}', space=sflag, size = 0x4, scoped, tag = 'scoped memory for tpu_custom_call.1']
    #allocation11 [shape = 'u8[4096]{0}', space=vmem, size = 0x1000, scoped, tag = 'input window, operand 2, single buffered']
    #allocation12 [shape = 'u8[4096]{0}', space=vmem, size = 0x1000, scoped, tag = 'input window, operand 3, single buffered']
    #allocation13 [shape = 's32[1]{0}', space=sflag, size = 0x4, scoped, tag = 'scoped memory for tpu_custom_call.1']
    #allocation14 [shape = 'u8[4096]{0}', space=vmem, size = 0x1000, scoped, tag = 'output window, operand 0, single buffered']
    #allocation15 [shape = 'u8[4096]{0}', space=vmem, size = 0x1000, scoped, tag = 'output window, operand 1, single buffered']
    #allocation16 [shape = 's32[1]{0}', space=sflag, size = 0x4, scoped, tag = 'scoped memory for tpu_custom_call.1']
    %11 = vsyncpa [#allocation7], 0
    %12 = vsyncpa [#allocation10], 0
    %13 = vsyncpa [#allocation13], 0
    %14 = vsyncpa [#allocation8], 0
    %15 = vsyncpa [#allocation16], 0
    // Predicated region
    $region2: #{tpu_custom_call.1} parent=1 // pred_check
      _
    $region3: #{tpu_custom_call.1} parent=1 // pred_check_branch
      %17 = sbr.rel (0) target = $region5
    $region4: #{tpu_custom_call.1} parent=1 // pred_region
      %s19 = ssub.s32 128, 128
      %20 = vsyncadd [#allocation7], %s19
      %s22 = sshll.u32 [#allocation6], 4
      %s23 = int_to_ptr.vmem [resolvable:$true] %s22
      %25 = dma.hbm_to_vmem [thread:$0]  %s0, 128, %s23, [#allocation7]
    $region5: #{tpu_custom_call.1} parent=1 // pred_fallthru
      _
    // Predicated region
    $region6: #{tpu_custom_call.1} parent=1 // pred_check
      _
    $region7: #{tpu_custom_call.1} parent=1 // pred_check_branch
      %27 = sbr.rel (0) target = $region9
    $region8: #{tpu_custom_call.1} parent=1 // pred_region
      %s29 = ssub.s32 128, 128
      %30 = vsyncadd [#allocation10], %s29
      %s32 = sshll.u32 [#allocation9], 4
      %s33 = int_to_ptr.vmem [resolvable:$true] %s32
      %35 = dma.hbm_to_vmem [thread:$0]  %s1, 128, %s33, [#allocation10]
    $region9: #{tpu_custom_call.1} parent=1 // pred_fallthru
      _
    // Predicated region
    $region10: #{tpu_custom_call.1} parent=1 // pred_check
      _
    $region11: #{tpu_custom_call.1} parent=1 // pred_check_branch
      %37 = sbr.rel (0) target = $region13
    $region12: #{tpu_custom_call.1} parent=1 // pred_region
      %s39 = ssub.s32 128, 128
      %40 = vsyncadd [#allocation10], %s39
      %s42 = sshll.u32 [#allocation11], 4
      %s43 = int_to_ptr.vmem [resolvable:$true] %s42
      %45 = dma.hbm_to_vmem [thread:$0]  %s2, 128, %s43, [#allocation10]
    $region13: #{tpu_custom_call.1} parent=1 // pred_fallthru
      _
    // Predicated region
    $region14: #{tpu_custom_call.1} parent=1 // pred_check
      _
    $region15: #{tpu_custom_call.1} parent=1 // pred_check_branch
      %47 = sbr.rel (0) target = $region17
    $region16: #{tpu_custom_call.1} parent=1 // pred_region
      %s49 = ssub.s32 128, 128
      %50 = vsyncadd [#allocation13], %s49
      %s52 = sshll.u32 [#allocation12], 4
      %s53 = int_to_ptr.vmem [resolvable:$true] %s52
      %55 = dma.hbm_to_vmem [thread:$0]  %s3, 128, %s53, [#allocation13]
    $region17: #{tpu_custom_call.1} parent=1 // pred_fallthru
      _
    // Predicated region
    $region18: #{tpu_custom_call.1} parent=1 // pred_check
      _
    $region19: #{tpu_custom_call.1} parent=1 // pred_check_branch
      %57 = sbr.rel (0) target = $region21
    $region20: #{tpu_custom_call.1} parent=1 // pred_region
      %58 = dma.done [#allocation7], 128
    $region21: #{tpu_custom_call.1} parent=1 // pred_fallthru
      _
    // Predicated region
    $region22: #{tpu_custom_call.1} parent=1 // pred_check
      _
    $region23: #{tpu_custom_call.1} parent=1 // pred_check_branch
      %60 = sbr.rel (0) target = $region25
    $region24: #{tpu_custom_call.1} parent=1 // pred_region
      %61 = dma.done [#allocation10], 128
    $region25: #{tpu_custom_call.1} parent=1 // pred_fallthru
      _
    // Predicated region
    $region26: #{tpu_custom_call.1} parent=1 // pred_check
      _
    $region27: #{tpu_custom_call.1} parent=1 // pred_check_branch
      %63 = sbr.rel (0) target = $region29
    $region28: #{tpu_custom_call.1} parent=1 // pred_region
      %64 = dma.done [#allocation10], 128
    $region29: #{tpu_custom_call.1} parent=1 // pred_fallthru
      _
    // Predicated region
    $region30: #{tpu_custom_call.1} parent=1 // pred_check
      _
    $region31: #{tpu_custom_call.1} parent=1 // pred_check_branch
      %66 = sbr.rel (0) target = $region33
    $region32: #{tpu_custom_call.1} parent=1 // pred_region
      %67 = dma.done [#allocation13], 128
    $region33: #{tpu_custom_call.1} parent=1 // pred_fallthru
      _
    %p68 = scmp.eq.s32.totalorder 0, 0
    // Predicated region
    $region34: #{tpu_custom_call.1} parent=1 // pred_check
      %p69 = pneg %p68
    $region35: #{tpu_custom_call.1} parent=1 // pred_check_branch
      %71 = sbr.rel (%p69) target = $region37
    $region36: #{tpu_custom_call.1} parent=1 // pred_region
      %vm72 = vcmask 7168
      %73 = vst.msk [vmem:[#allocation2] sm:$0xff] %vm72, -inf
      %74 = vst.msk [vmem:[#allocation3] sm:$0xff] %vm72, 0.0
      %75 = vst.msk [vmem:[#allocation4] sm:$0xff] %vm72, -inf
      %76 = vst.msk [vmem:[#allocation5] sm:$0xff] %vm72, 0.0
    $region37: #{tpu_custom_call.1} parent=1 // pred_fallthru
      _
    %v77 = vld [vmem:[#allocation11] sm:$0xff]
    %v78 = vld [vmem:[#allocation12] sm:$0xff]
    %v79 = vlaneseq
    %v80 = vshrl.u32 %v79, 7
    %s81 = smul.u32 0, 8
    %v82 = vstv %s81
    %v83 = vadd.s32 %v80, %v82
    %v84 = vlaneseq
    %v85 = vand.u32 %v84, 127
    %s86 = smul.u32 0, 8
    %v87 = vstv %s86
    %v88 = vadd.s32 %v85, %v87
    %vm89 = vcmp.eq.s32.totalorder %v83, %v88
    %v90 = vld [vmem:[#allocation6] sm:$0xff]
    %vm91 = vcmask 261120
    %v93 = vsel %vm91, %v90, 0
    %v96 = vsel %vm91, %v77, 0
    %98 = vmatprep.subr.mxu0 0.0
    %v99 = vand.u32 %v96, 4294901760
    %100 = vmatpush1.xpose.msra.mxu0 %v99
    %101 = vmatprep.subr.mxu0 0.0
    %102 = vmatpush1.xpose.msra.mxu0 0.0
    %103 = vmatprep.subr.mxu0 0.0
    %104 = vmatpush1.xpose.msra.mxu0 0.0
    %105 = vmatprep.subr.mxu0 0.0
    %106 = vmatpush1.xpose.msra.mxu0 0.0
    %107 = vmatprep.subr.mxu0 0.0
    %108 = vmatpush1.xpose.msra.mxu0 0.0
    %109 = vmatprep.subr.mxu0 0.0
    %110 = vmatpush1.xpose.msra.mxu0 0.0
    %111 = vmatprep.subr.mxu0 0.0
    %112 = vmatpush1.xpose.msra.mxu0 0.0
    %113 = vmatprep.subr.mxu0 0.0
    %114 = vmatpush1.xpose.msra.mxu0 0.0
    %115 = vmatprep.subr.mxu0 0.0
    %116 = vmatpush1.xpose.msra.mxu0 0.0
    %117 = vmatprep.subr.mxu0 0.0
    %118 = vmatpush1.xpose.msra.mxu0 0.0
    %119 = vmatprep.subr.mxu0 0.0
    %120 = vmatpush1.xpose.msra.mxu0 0.0
    %121 = vmatprep.subr.mxu0 0.0
    %122 = vmatpush1.xpose.msra.mxu0 0.0
    %123 = vmatprep.subr.mxu0 0.0
    %124 = vmatpush1.xpose.msra.mxu0 0.0
    %125 = vmatprep.subr.mxu0 0.0
    %126 = vmatpush1.xpose.msra.mxu0 0.0
    %127 = vmatprep.subr.mxu0 0.0
    %128 = vmatpush1.xpose.msra.mxu0 0.0
    %129 = vmatprep.subr.mxu0 0.0
    %130 = vmatpush1.xpose.msra.mxu0 0.0
    %131 = vmatprep.subr.mxu0 0.0
    %132 = vmatpush1.xpose.msra.mxu0 0.0
    %133 = vmatprep.subr.mxu0 0.0
    %134 = vmatpush1.xpose.msra.mxu0 0.0
    %135 = vmatprep.subr.mxu0 0.0
    %136 = vmatpush1.xpose.msra.mxu0 0.0
    %137 = vmatprep.subr.mxu0 0.0
    %138 = vmatpush1.xpose.msra.mxu0 0.0
    %139 = vmatprep.subr.mxu0 0.0
    %140 = vmatpush1.xpose.msra.mxu0 0.0
    %141 = vmatprep.subr.mxu0 0.0
    %142 = vmatpush1.xpose.msra.mxu0 0.0
    %143 = vmatprep.subr.mxu0 0.0
    %144 = vmatpush1.xpose.msra.mxu0 0.0
    %145 = vmatprep.subr.mxu0 0.0
    %146 = vmatpush1.xpose.msra.mxu0 0.0
    %147 = vmatprep.subr.mxu0 0.0
    %148 = vmatpush1.xpose.msra.mxu0 0.0
    %149 = vmatprep.subr.mxu0 0.0
    %150 = vmatpush1.xpose.msra.mxu0 0.0
    %151 = vmatprep.subr.mxu0 0.0
    %152 = vmatpush1.xpose.msra.mxu0 0.0
    %153 = vmatprep.subr.mxu0 0.0
    %154 = vmatpush1.xpose.msra.mxu0 0.0
    %155 = vmatprep.subr.mxu0 0.0
    %156 = vmatpush1.xpose.msra.mxu0 0.0
    %157 = vmatprep.subr.mxu0 0.0
    %158 = vmatpush1.xpose.msra.mxu0 0.0
    %159 = vmatprep.subr.mxu0 0.0
    %160 = vmatpush1.xpose.msra.mxu0 0.0
    %161 = vmatprep.subr.mxu0 0.0
    %162 = vmatpush1.xpose.msra.mxu0 0.0
    %163 = vmatprep.mubr.f32.mxu0 0.0
    %v164 = vand.u32 %v93, 4294901760
    %v165 = vsub.f32 %v93, %v164
    %v166 = vand.u32 %v165, 4294901760
    %v167 = vsub.f32 %v165, %v166
    %v168 = vand.u32 %v167, 4294901760
    %169 = vmatmul.mubr.f32.gmra.mrb[0].mxu0 %v168
    %v170 = vpop.f32.mrb[0].mxu0
    %v171 = vadd.f32 0.0, %v170
    %v172 = vpop.f32.mrb[0].mxu0
    %173 = vdwg.mxu0
    %174 = vmatprep.subr.mxu0 0.0
    %v175 = vand.u32 %v96, 4294901760
    %v176 = vsub.f32 %v96, %v175
    %v177 = vand.u32 %v176, 4294901760
    %v178 = vsub.f32 %v176, %v177
    %v179 = vand.u32 %v178, 4294901760
    %180 = vmatpush1.xpose.msra.mxu0 %v179
    %181 = vmatprep.subr.mxu0 0.0
    %182 = vmatpush1.xpose.msra.mxu0 0.0
    %183 = vmatprep.subr.mxu0 0.0
    %184 = vmatpush1.xpose.msra.mxu0 0.0
    %185 = vmatprep.subr.mxu0 0.0
    %186 = vmatpush1.xpose.msra.mxu0 0.0
    %187 = vmatprep.subr.mxu0 0.0
    %188 = vmatpush1.xpose.msra.mxu0 0.0
    %189 = vmatprep.subr.mxu0 0.0
    %190 = vmatpush1.xpose.msra.mxu0 0.0
    %191 = vmatprep.subr.mxu0 0.0
    %192 = vmatpush1.xpose.msra.mxu0 0.0
    %193 = vmatprep.subr.mxu0 0.0
    %194 = vmatpush1.xpose.msra.mxu0 0.0
    %195 = vmatprep.subr.mxu0 0.0
    %196 = vmatpush1.xpose.msra.mxu0 0.0
    %197 = vmatprep.subr.mxu0 0.0
    %198 = vmatpush1.xpose.msra.mxu0 0.0
    %199 = vmatprep.subr.mxu0 0.0
    %200 = vmatpush1.xpose.msra.mxu0 0.0
    %201 = vmatprep.subr.mxu0 0.0
    %202 = vmatpush1.xpose.msra.mxu0 0.0
    %203 = vmatprep.subr.mxu0 0.0
    %204 = vmatpush1.xpose.msra.mxu0 0.0
    %205 = vmatprep.subr.mxu0 0.0
    %206 = vmatpush1.xpose.msra.mxu0 0.0
    %207 = vmatprep.subr.mxu0 0.0
    %208 = vmatpush1.xpose.msra.mxu0 0.0
    %209 = vmatprep.subr.mxu0 0.0
    %210 = vmatpush1.xpose.msra.mxu0 0.0
    %211 = vmatprep.subr.mxu0 0.0
    %212 = vmatpush1.xpose.msra.mxu0 0.0
    %213 = vmatprep.subr.mxu0 0.0
    %214 = vmatpush1.xpose.msra.mxu0 0.0
    %215 = vmatprep.subr.mxu0 0.0
    %216 = vmatpush1.xpose.msra.mxu0 0.0
    %217 = vmatprep.subr.mxu0 0.0
    %218 = vmatpush1.xpose.msra.mxu0 0.0
    %219 = vmatprep.subr.mxu0 0.0
    %220 = vmatpush1.xpose.msra.mxu0 0.0
    %221 = vmatprep.subr.mxu0 0.0
    %222 = vmatpush1.xpose.msra.mxu0 0.0
    %223 = vmatprep.subr.mxu0 0.0
    %224 = vmatpush1.xpose.msra.mxu0 0.0
    %225 = vmatprep.subr.mxu0 0.0
    %226 = vmatpush1.xpose.msra.mxu0 0.0
    %227 = vmatprep.subr.mxu0 0.0
    %228 = vmatpush1.xpose.msra.mxu0 0.0
    %229 = vmatprep.subr.mxu0 0.0
    %230 = vmatpush1.xpose.msra.mxu0 0.0
    %231 = vmatprep.subr.mxu0 0.0
    %232 = vmatpush1.xpose.msra.mxu0 0.0
    %233 = vmatprep.subr.mxu0 0.0
    %234 = vmatpush1.xpose.msra.mxu0 0.0
    %235 = vmatprep.subr.mxu0 0.0
    %236 = vmatpush1.xpose.msra.mxu0 0.0
    %237 = vmatprep.subr.mxu0 0.0
    %238 = vmatpush1.xpose.msra.mxu0 0.0
    %239 = vmatprep.subr.mxu0 0.0
    %240 = vmatpush1.xpose.msra.mxu0 0.0
    %241 = vmatprep.subr.mxu0 0.0
    %242 = vmatpush1.xpose.msra.mxu0 0.0
    %243 = vmatprep.mubr.f32.mxu0 0.0
    %v244 = vand.u32 %v93, 4294901760
    %245 = vmatmul.mubr.f32.gmra.mrb[0].mxu0 %v244
    %v246 = vpop.f32.mrb[0].mxu0
    %v247 = vadd.f32 %v171, %v246
    %v248 = vpop.f32.mrb[0].mxu0
    %249 = vdwg.mxu0
    %250 = vmatprep.subr.mxu0 0.0
    %v251 = vand.u32 %v96, 4294901760
    %v252 = vsub.f32 %v96, %v251
    %253 = vmatpush1.xpose.msra.mxu0 %v252
    %254 = vmatprep.subr.mxu0 0.0
    %255 = vmatpush1.xpose.msra.mxu0 0.0
    %256 = vmatprep.subr.mxu0 0.0
    %257 = vmatpush1.xpose.msra.mxu0 0.0
    %258 = vmatprep.subr.mxu0 0.0
    %259 = vmatpush1.xpose.msra.mxu0 0.0
    %260 = vmatprep.subr.mxu0 0.0
    %261 = vmatpush1.xpose.msra.mxu0 0.0
    %262 = vmatprep.subr.mxu0 0.0
    %263 = vmatpush1.xpose.msra.mxu0 0.0
    %264 = vmatprep.subr.mxu0 0.0
    %265 = vmatpush1.xpose.msra.mxu0 0.0
    %266 = vmatprep.subr.mxu0 0.0
    %267 = vmatpush1.xpose.msra.mxu0 0.0
    %268 = vmatprep.subr.mxu0 0.0
    %269 = vmatpush1.xpose.msra.mxu0 0.0
    %270 = vmatprep.subr.mxu0 0.0
    %271 = vmatpush1.xpose.msra.mxu0 0.0
    %272 = vmatprep.subr.mxu0 0.0
    %273 = vmatpush1.xpose.msra.mxu0 0.0
    %274 = vmatprep.subr.mxu0 0.0
    %275 = vmatpush1.xpose.msra.mxu0 0.0
    %276 = vmatprep.subr.mxu0 0.0
    %277 = vmatpush1.xpose.msra.mxu0 0.0
    %278 = vmatprep.subr.mxu0 0.0
    %279 = vmatpush1.xpose.msra.mxu0 0.0
    %280 = vmatprep.subr.mxu0 0.0
    %281 = vmatpush1.xpose.msra.mxu0 0.0
    %282 = vmatprep.subr.mxu0 0.0
    %283 = vmatpush1.xpose.msra.mxu0 0.0
    %284 = vmatprep.subr.mxu0 0.0
    %285 = vmatpush1.xpose.msra.mxu0 0.0
    %286 = vmatprep.subr.mxu0 0.0
    %287 = vmatpush1.xpose.msra.mxu0 0.0
    %288 = vmatprep.subr.mxu0 0.0
    %289 = vmatpush1.xpose.msra.mxu0 0.0
    %290 = vmatprep.subr.mxu0 0.0
    %291 = vmatpush1.xpose.msra.mxu0 0.0
    %292 = vmatprep.subr.mxu0 0.0
    %293 = vmatpush1.xpose.msra.mxu0 0.0
    %294 = vmatprep.subr.mxu0 0.0
    %295 = vmatpush1.xpose.msra.mxu0 0.0
    %296 = vmatprep.subr.mxu0 0.0
    %297 = vmatpush1.xpose.msra.mxu0 0.0
    %298 = vmatprep.subr.mxu0 0.0
    %299 = vmatpush1.xpose.msra.mxu0 0.0
    %300 = vmatprep.subr.mxu0 0.0
    %301 = vmatpush1.xpose.msra.mxu0 0.0
    %302 = vmatprep.subr.mxu0 0.0
    %303 = vmatpush1.xpose.msra.mxu0 0.0
    %304 = vmatprep.subr.mxu0 0.0
    %305 = vmatpush1.xpose.msra.mxu0 0.0
    %306 = vmatprep.subr.mxu0 0.0
    %307 = vmatpush1.xpose.msra.mxu0 0.0
    %308 = vmatprep.subr.mxu0 0.0
    %309 = vmatpush1.xpose.msra.mxu0 0.0
    %310 = vmatprep.subr.mxu0 0.0
    %311 = vmatpush1.xpose.msra.mxu0 0.0
    %312 = vmatprep.subr.mxu0 0.0
    %313 = vmatpush1.xpose.msra.mxu0 0.0
    %314 = vmatprep.subr.mxu0 0.0
    %315 = vmatpush1.xpose.msra.mxu0 0.0
    %316 = vmatprep.mubr.f32.mxu0 0.0
    %v317 = vand.u32 %v93, 4294901760
    %v318 = vsub.f32 %v93, %v317
    %319 = vmatmul.mubr.f32.gmra.mrb[0].mxu0 %v318
    %v320 = vpop.f32.mrb[0].mxu0
    %v321 = vadd.f32 %v247, %v320
    %v322 = vpop.f32.mrb[0].mxu0
    %323 = vdwg.mxu0
    %324 = vmatprep.subr.mxu0 0.0
    %v325 = vand.u32 %v96, 4294901760
    %326 = vmatpush1.xpose.msra.mxu0 %v325
    %327 = vmatprep.subr.mxu0 0.0
    %328 = vmatpush1.xpose.msra.mxu0 0.0
    %329 = vmatprep.subr.mxu0 0.0
    %330 = vmatpush1.xpose.msra.mxu0 0.0
    %331 = vmatprep.subr.mxu0 0.0
    %332 = vmatpush1.xpose.msra.mxu0 0.0
    %333 = vmatprep.subr.mxu0 0.0
    %334 = vmatpush1.xpose.msra.mxu0 0.0
    %335 = vmatprep.subr.mxu0 0.0
    %336 = vmatpush1.xpose.msra.mxu0 0.0
    %337 = vmatprep.subr.mxu0 0.0
    %338 = vmatpush1.xpose.msra.mxu0 0.0
    %339 = vmatprep.subr.mxu0 0.0
    %340 = vmatpush1.xpose.msra.mxu0 0.0
    %341 = vmatprep.subr.mxu0 0.0
    %342 = vmatpush1.xpose.msra.mxu0 0.0
    %343 = vmatprep.subr.mxu0 0.0
    %344 = vmatpush1.xpose.msra.mxu0 0.0
    %345 = vmatprep.subr.mxu0 0.0
    %346 = vmatpush1.xpose.msra.mxu0 0.0
    %347 = vmatprep.subr.mxu0 0.0
    %348 = vmatpush1.xpose.msra.mxu0 0.0
    %349 = vmatprep.subr.mxu0 0.0
    %350 = vmatpush1.xpose.msra.mxu0 0.0
    %351 = vmatprep.subr.mxu0 0.0
    %352 = vmatpush1.xpose.msra.mxu0 0.0
    %353 = vmatprep.subr.mxu0 0.0
    %354 = vmatpush1.xpose.msra.mxu0 0.0
    %355 = vmatprep.subr.mxu0 0.0
    %356 = vmatpush1.xpose.msra.mxu0 0.0
    %357 = vmatprep.subr.mxu0 0.0
    %358 = vmatpush1.xpose.msra.mxu0 0.0
    %359 = vmatprep.subr.mxu0 0.0
    %360 = vmatpush1.xpose.msra.mxu0 0.0
    %361 = vmatprep.subr.mxu0 0.0
    %362 = vmatpush1.xpose.msra.mxu0 0.0
    %363 = vmatprep.subr.mxu0 0.0
    %364 = vmatpush1.xpose.msra.mxu0 0.0
    %365 = vmatprep.subr.mxu0 0.0
    %366 = vmatpush1.xpose.msra.mxu0 0.0
    %367 = vmatprep.subr.mxu0 0.0
    %368 = vmatpush1.xpose.msra.mxu0 0.0
    %369 = vmatprep.subr.mxu0 0.0
    %370 = vmatpush1.xpose.msra.mxu0 0.0
    %371 = vmatprep.subr.mxu0 0.0
    %372 = vmatpush1.xpose.msra.mxu0 0.0
    %373 = vmatprep.subr.mxu0 0.0
    %374 = vmatpush1.xpose.msra.mxu0 0.0
    %375 = vmatprep.subr.mxu0 0.0
    %376 = vmatpush1.xpose.msra.mxu0 0.0
    %377 = vmatprep.subr.mxu0 0.0
    %378 = vmatpush1.xpose.msra.mxu0 0.0
    %379 = vmatprep.subr.mxu0 0.0
    %380 = vmatpush1.xpose.msra.mxu0 0.0
    %381 = vmatprep.subr.mxu0 0.0
    %382 = vmatpush1.xpose.msra.mxu0 0.0
    %383 = vmatprep.subr.mxu0 0.0
    %384 = vmatpush1.xpose.msra.mxu0 0.0
    %385 = vmatprep.subr.mxu0 0.0
    %386 = vmatpush1.xpose.msra.mxu0 0.0
    %387 = vmatprep.subr.mxu0 0.0
    %388 = vmatpush1.xpose.msra.mxu0 0.0
    %389 = vmatprep.mubr.f32.mxu0 0.0
    %v390 = vand.u32 %v93, 4294901760
    %v391 = vsub.f32 %v93, %v390
    %v392 = vand.u32 %v391, 4294901760
    %393 = vmatmul.mubr.f32.gmra.mrb[0].mxu0 %v392
    %v394 = vpop.f32.mrb[0].mxu0
    %v395 = vadd.f32 %v321, %v394
    %v396 = vpop.f32.mrb[0].mxu0
    %397 = vdwg.mxu0
    %398 = vmatprep.subr.mxu0 0.0
    %v399 = vand.u32 %v96, 4294901760
    %v400 = vsub.f32 %v96, %v399
    %v401 = vand.u32 %v400, 4294901760
    %402 = vmatpush1.xpose.msra.mxu0 %v401
    %403 = vmatprep.subr.mxu0 0.0
    %404 = vmatpush1.xpose.msra.mxu0 0.0
    %405 = vmatprep.subr.mxu0 0.0
    %406 = vmatpush1.xpose.msra.mxu0 0.0
    %407 = vmatprep.subr.mxu0 0.0
    %408 = vmatpush1.xpose.msra.mxu0 0.0
    %409 = vmatprep.subr.mxu0 0.0
    %410 = vmatpush1.xpose.msra.mxu0 0.0
    %411 = vmatprep.subr.mxu0 0.0
    %412 = vmatpush1.xpose.msra.mxu0 0.0
    %413 = vmatprep.subr.mxu0 0.0
    %414 = vmatpush1.xpose.msra.mxu0 0.0
    %415 = vmatprep.subr.mxu0 0.0
    %416 = vmatpush1.xpose.msra.mxu0 0.0
    %417 = vmatprep.subr.mxu0 0.0
    %418 = vmatpush1.xpose.msra.mxu0 0.0
    %419 = vmatprep.subr.mxu0 0.0
    %420 = vmatpush1.xpose.msra.mxu0 0.0
    %421 = vmatprep.subr.mxu0 0.0
    %422 = vmatpush1.xpose.msra.mxu0 0.0
    %423 = vmatprep.subr.mxu0 0.0
    %424 = vmatpush1.xpose.msra.mxu0 0.0
    %425 = vmatprep.subr.mxu0 0.0
    %426 = vmatpush1.xpose.msra.mxu0 0.0
    %427 = vmatprep.subr.mxu0 0.0
    %428 = vmatpush1.xpose.msra.mxu0 0.0
    %429 = vmatprep.subr.mxu0 0.0
    %430 = vmatpush1.xpose.msra.mxu0 0.0
    %431 = vmatprep.subr.mxu0 0.0
    %432 = vmatpush1.xpose.msra.mxu0 0.0
    %433 = vmatprep.subr.mxu0 0.0
    %434 = vmatpush1.xpose.msra.mxu0 0.0
    %435 = vmatprep.subr.mxu0 0.0
    %436 = vmatpush1.xpose.msra.mxu0 0.0
    %437 = vmatprep.subr.mxu0 0.0
    %438 = vmatpush1.xpose.msra.mxu0 0.0
    %439 = vmatprep.subr.mxu0 0.0
    %440 = vmatpush1.xpose.msra.mxu0 0.0
    %441 = vmatprep.subr.mxu0 0.0
    %442 = vmatpush1.xpose.msra.mxu0 0.0
    %443 = vmatprep.subr.mxu0 0.0
    %444 = vmatpush1.xpose.msra.mxu0 0.0
    %445 = vmatprep.subr.mxu0 0.0
    %446 = vmatpush1.xpose.msra.mxu0 0.0
    %447 = vmatprep.subr.mxu0 0.0
    %448 = vmatpush1.xpose.msra.mxu0 0.0
    %449 = vmatprep.subr.mxu0 0.0
    %450 = vmatpush1.xpose.msra.mxu0 0.0
    %451 = vmatprep.subr.mxu0 0.0
    %452 = vmatpush1.xpose.msra.mxu0 0.0
    %453 = vmatprep.subr.mxu0 0.0
    %454 = vmatpush1.xpose.msra.mxu0 0.0
    %455 = vmatprep.subr.mxu0 0.0
    %456 = vmatpush1.xpose.msra.mxu0 0.0
    %457 = vmatprep.subr.mxu0 0.0
    %458 = vmatpush1.xpose.msra.mxu0 0.0
    %459 = vmatprep.subr.mxu0 0.0
    %460 = vmatpush1.xpose.msra.mxu0 0.0
    %461 = vmatprep.subr.mxu0 0.0
    %462 = vmatpush1.xpose.msra.mxu0 0.0
    %463 = vmatprep.subr.mxu0 0.0
    %464 = vmatpush1.xpose.msra.mxu0 0.0
    %465 = vmatprep.mubr.f32.mxu0 0.0
    %v466 = vand.u32 %v93, 4294901760
    %467 = vmatmul.mubr.f32.gmra.mrb[0].mxu0 %v466
    %v468 = vpop.f32.mrb[0].mxu0
    %v469 = vadd.f32 %v395, %v468
    %v470 = vpop.f32.mrb[0].mxu0
    %471 = vdwg.mxu0
    %472 = vmatprep.subr.mxu0 0.0
    %v473 = vand.u32 %v96, 4294901760
    %474 = vmatpush1.xpose.msra.mxu0 %v473
    %475 = vmatprep.subr.mxu0 0.0
    %476 = vmatpush1.xpose.msra.mxu0 0.0
    %477 = vmatprep.subr.mxu0 0.0
    %478 = vmatpush1.xpose.msra.mxu0 0.0
    %479 = vmatprep.subr.mxu0 0.0
    %480 = vmatpush1.xpose.msra.mxu0 0.0
    %481 = vmatprep.subr.mxu0 0.0
    %482 = vmatpush1.xpose.msra.mxu0 0.0
    %483 = vmatprep.subr.mxu0 0.0
    %484 = vmatpush1.xpose.msra.mxu0 0.0
    %485 = vmatprep.subr.mxu0 0.0
    %486 = vmatpush1.xpose.msra.mxu0 0.0
    %487 = vmatprep.subr.mxu0 0.0
    %488 = vmatpush1.xpose.msra.mxu0 0.0
    %489 = vmatprep.subr.mxu0 0.0
    %490 = vmatpush1.xpose.msra.mxu0 0.0
    %491 = vmatprep.subr.mxu0 0.0
    %492 = vmatpush1.xpose.msra.mxu0 0.0
    %493 = vmatprep.subr.mxu0 0.0
    %494 = vmatpush1.xpose.msra.mxu0 0.0
    %495 = vmatprep.subr.mxu0 0.0
    %496 = vmatpush1.xpose.msra.mxu0 0.0
    %497 = vmatprep.subr.mxu0 0.0
    %498 = vmatpush1.xpose.msra.mxu0 0.0
    %499 = vmatprep.subr.mxu0 0.0
    %500 = vmatpush1.xpose.msra.mxu0 0.0
    %501 = vmatprep.subr.mxu0 0.0
    %502 = vmatpush1.xpose.msra.mxu0 0.0
    %503 = vmatprep.subr.mxu0 0.0
    %504 = vmatpush1.xpose.msra.mxu0 0.0
    %505 = vmatprep.subr.mxu0 0.0
    %506 = vmatpush1.xpose.msra.mxu0 0.0
    %507 = vmatprep.subr.mxu0 0.0
    %508 = vmatpush1.xpose.msra.mxu0 0.0
    %509 = vmatprep.subr.mxu0 0.0
    %510 = vmatpush1.xpose.msra.mxu0 0.0
    %511 = vmatprep.subr.mxu0 0.0
    %512 = vmatpush1.xpose.msra.mxu0 0.0
    %513 = vmatprep.subr.mxu0 0.0
    %514 = vmatpush1.xpose.msra.mxu0 0.0
    %515 = vmatprep.subr.mxu0 0.0
    %516 = vmatpush1.xpose.msra.mxu0 0.0
    %517 = vmatprep.subr.mxu0 0.0
    %518 = vmatpush1.xpose.msra.mxu0 0.0
    %519 = vmatprep.subr.mxu0 0.0
    %520 = vmatpush1.xpose.msra.mxu0 0.0
    %521 = vmatprep.subr.mxu0 0.0
    %522 = vmatpush1.xpose.msra.mxu0 0.0
    %523 = vmatprep.subr.mxu0 0.0
    %524 = vmatpush1.xpose.msra.mxu0 0.0
    %525 = vmatprep.subr.mxu0 0.0
    %526 = vmatpush1.xpose.msra.mxu0 0.0
    %527 = vmatprep.subr.mxu0 0.0
    %528 = vmatpush1.xpose.msra.mxu0 0.0
    %529 = vmatprep.subr.mxu0 0.0
    %530 = vmatpush1.xpose.msra.mxu0 0.0
    %531 = vmatprep.subr.mxu0 0.0
    %532 = vmatpush1.xpose.msra.mxu0 0.0
    %533 = vmatprep.subr.mxu0 0.0
    %534 = vmatpush1.xpose.msra.mxu0 0.0
    %535 = vmatprep.subr.mxu0 0.0
    %536 = vmatpush1.xpose.msra.mxu0 0.0
    %537 = vmatprep.mubr.f32.mxu0 0.0
    %v538 = vand.u32 %v93, 4294901760
    %539 = vmatmul.mubr.f32.gmra.mrb[0].mxu0 %v538
    %v540 = vpop.f32.mrb[0].mxu0
    %v541 = vadd.f32 %v469, %v540
    %v542 = vpop.f32.mrb[0].mxu0
    %543 = vdwg.mxu0
    %v544 = vmul.f32 %v541, 2.0
    %v546 = vsel %vm91, %v78, 0
    %548 = vmatprep.subr.mxu0 0.0
    %v549 = vand.u32 %v546, 4294901760
    %550 = vmatpush1.xpose.msra.mxu0 %v549
    %551 = vmatprep.subr.mxu0 0.0
    %552 = vmatpush1.xpose.msra.mxu0 0.0
    %553 = vmatprep.subr.mxu0 0.0
    %554 = vmatpush1.xpose.msra.mxu0 0.0
    %555 = vmatprep.subr.mxu0 0.0
    %556 = vmatpush1.xpose.msra.mxu0 0.0
    %557 = vmatprep.subr.mxu0 0.0
    %558 = vmatpush1.xpose.msra.mxu0 0.0
    %559 = vmatprep.subr.mxu0 0.0
    %560 = vmatpush1.xpose.msra.mxu0 0.0
    %561 = vmatprep.subr.mxu0 0.0
    %562 = vmatpush1.xpose.msra.mxu0 0.0
    %563 = vmatprep.subr.mxu0 0.0
    %564 = vmatpush1.xpose.msra.mxu0 0.0
    %565 = vmatprep.subr.mxu0 0.0
    %566 = vmatpush1.xpose.msra.mxu0 0.0
    %567 = vmatprep.subr.mxu0 0.0
    %568 = vmatpush1.xpose.msra.mxu0 0.0
    %569 = vmatprep.subr.mxu0 0.0
    %570 = vmatpush1.xpose.msra.mxu0 0.0
    %571 = vmatprep.subr.mxu0 0.0
    %572 = vmatpush1.xpose.msra.mxu0 0.0
    %573 = vmatprep.subr.mxu0 0.0
    %574 = vmatpush1.xpose.msra.mxu0 0.0
    %575 = vmatprep.subr.mxu0 0.0
    %576 = vmatpush1.xpose.msra.mxu0 0.0
    %577 = vmatprep.subr.mxu0 0.0
    %578 = vmatpush1.xpose.msra.mxu0 0.0
    %579 = vmatprep.subr.mxu0 0.0
    %580 = vmatpush1.xpose.msra.mxu0 0.0
    %581 = vmatprep.subr.mxu0 0.0
    %582 = vmatpush1.xpose.msra.mxu0 0.0
    %583 = vmatprep.subr.mxu0 0.0
    %584 = vmatpush1.xpose.msra.mxu0 0.0
    %585 = vmatprep.subr.mxu0 0.0
    %586 = vmatpush1.xpose.msra.mxu0 0.0
    %587 = vmatprep.subr.mxu0 0.0
    %588 = vmatpush1.xpose.msra.mxu0 0.0
    %589 = vmatprep.subr.mxu0 0.0
    %590 = vmatpush1.xpose.msra.mxu0 0.0
    %591 = vmatprep.subr.mxu0 0.0
    %592 = vmatpush1.xpose.msra.mxu0 0.0
    %593 = vmatprep.subr.mxu0 0.0
    %594 = vmatpush1.xpose.msra.mxu0 0.0
    %595 = vmatprep.subr.mxu0 0.0
    %596 = vmatpush1.xpose.msra.mxu0 0.0
    %597 = vmatprep.subr.mxu0 0.0
    %598 = vmatpush1.xpose.msra.mxu0 0.0
    %599 = vmatprep.subr.mxu0 0.0
    %600 = vmatpush1.xpose.msra.mxu0 0.0
    %601 = vmatprep.subr.mxu0 0.0
    %602 = vmatpush1.xpose.msra.mxu0 0.0
    %603 = vmatprep.subr.mxu0 0.0
    %604 = vmatpush1.xpose.msra.mxu0 0.0
    %605 = vmatprep.subr.mxu0 0.0
    %606 = vmatpush1.xpose.msra.mxu0 0.0
    %607 = vmatprep.subr.mxu0 0.0
    %608 = vmatpush1.xpose.msra.mxu0 0.0
    %609 = vmatprep.subr.mxu0 0.0
    %610 = vmatpush1.xpose.msra.mxu0 0.0
    %611 = vmatprep.subr.mxu0 0.0
    %612 = vmatpush1.xpose.msra.mxu0 0.0
    %613 = vmatprep.mubr.f32.mxu0 0.0
    %v614 = vand.u32 %v93, 4294901760
    %v615 = vsub.f32 %v93, %v614
    %v616 = vand.u32 %v615, 4294901760
    %v617 = vsub.f32 %v615, %v616
    %v618 = vand.u32 %v617, 4294901760
    %619 = vmatmul.mubr.f32.gmra.mrb[0].mxu0 %v618
    %v620 = vpop.f32.mrb[0].mxu0
    %v621 = vadd.f32 0.0, %v620
    %v622 = vpop.f32.mrb[0].mxu0
    %623 = vdwg.mxu0
    %624 = vmatprep.subr.mxu0 0.0
    %v625 = vand.u32 %v546, 4294901760
    %v626 = vsub.f32 %v546, %v625
    %v627 = vand.u32 %v626, 4294901760
    %v628 = vsub.f32 %v626, %v627
    %v629 = vand.u32 %v628, 4294901760
    %630 = vmatpush1.xpose.msra.mxu0 %v629
    %631 = vmatprep.subr.mxu0 0.0
    %632 = vmatpush1.xpose.msra.mxu0 0.0
    %633 = vmatprep.subr.mxu0 0.0
    %634 = vmatpush1.xpose.msra.mxu0 0.0
    %635 = vmatprep.subr.mxu0 0.0
    %636 = vmatpush1.xpose.msra.mxu0 0.0
    %637 = vmatprep.subr.mxu0 0.0
    %638 = vmatpush1.xpose.msra.mxu0 0.0
    %639 = vmatprep.subr.mxu0 0.0
    %640 = vmatpush1.xpose.msra.mxu0 0.0
    %641 = vmatprep.subr.mxu0 0.0
    %642 = vmatpush1.xpose.msra.mxu0 0.0
    %643 = vmatprep.subr.mxu0 0.0
    %644 = vmatpush1.xpose.msra.mxu0 0.0
    %645 = vmatprep.subr.mxu0 0.0
    %646 = vmatpush1.xpose.msra.mxu0 0.0
    %647 = vmatprep.subr.mxu0 0.0
    %648 = vmatpush1.xpose.msra.mxu0 0.0
    %649 = vmatprep.subr.mxu0 0.0
    %650 = vmatpush1.xpose.msra.mxu0 0.0
    %651 = vmatprep.subr.mxu0 0.0
    %652 = vmatpush1.xpose.msra.mxu0 0.0
    %653 = vmatprep.subr.mxu0 0.0
    %654 = vmatpush1.xpose.msra.mxu0 0.0
    %655 = vmatprep.subr.mxu0 0.0
    %656 = vmatpush1.xpose.msra.mxu0 0.0
    %657 = vmatprep.subr.mxu0 0.0
    %658 = vmatpush1.xpose.msra.mxu0 0.0
    %659 = vmatprep.subr.mxu0 0.0
    %660 = vmatpush1.xpose.msra.mxu0 0.0
    %661 = vmatprep.subr.mxu0 0.0
    %662 = vmatpush1.xpose.msra.mxu0 0.0
    %663 = vmatprep.subr.mxu0 0.0
    %664 = vmatpush1.xpose.msra.mxu0 0.0
    %665 = vmatprep.subr.mxu0 0.0
    %666 = vmatpush1.xpose.msra.mxu0 0.0
    %667 = vmatprep.subr.mxu0 0.0
    %668 = vmatpush1.xpose.msra.mxu0 0.0
    %669 = vmatprep.subr.mxu0 0.0
    %670 = vmatpush1.xpose.msra.mxu0 0.0
    %671 = vmatprep.subr.mxu0 0.0
    %672 = vmatpush1.xpose.msra.mxu0 0.0
    %673 = vmatprep.subr.mxu0 0.0
    %674 = vmatpush1.xpose.msra.mxu0 0.0
    %675 = vmatprep.subr.mxu0 0.0
    %676 = vmatpush1.xpose.msra.mxu0 0.0
    %677 = vmatprep.subr.mxu0 0.0
    %678 = vmatpush1.xpose.msra.mxu0 0.0
    %679 = vmatprep.subr.mxu0 0.0
    %680 = vmatpush1.xpose.msra.mxu0 0.0
    %681 = vmatprep.subr.mxu0 0.0
    %682 = vmatpush1.xpose.msra.mxu0 0.0
    %683 = vmatprep.subr.mxu0 0.0
    %684 = vmatpush1.xpose.msra.mxu0 0.0
    %685 = vmatprep.subr.mxu0 0.0
    %686 = vmatpush1.xpose.msra.mxu0 0.0
    %687 = vmatprep.subr.mxu0 0.0
    %688 = vmatpush1.xpose.msra.mxu0 0.0
    %689 = vmatprep.subr.mxu0 0.0
    %690 = vmatpush1.xpose.msra.mxu0 0.0
    %691 = vmatprep.subr.mxu0 0.0
    %692 = vmatpush1.xpose.msra.mxu0 0.0
    %693 = vmatprep.mubr.f32.mxu0 0.0
    %v694 = vand.u32 %v93, 4294901760
    %695 = vmatmul.mubr.f32.gmra.mrb[0].mxu0 %v694
    %v696 = vpop.f32.mrb[0].mxu0
    %v697 = vadd.f32 %v621, %v696
    %v698 = vpop.f32.mrb[0].mxu0
    %699 = vdwg.mxu0
    %700 = vmatprep.subr.mxu0 0.0
    %v701 = vand.u32 %v546, 4294901760
    %v702 = vsub.f32 %v546, %v701
    %703 = vmatpush1.xpose.msra.mxu0 %v702
    %704 = vmatprep.subr.mxu0 0.0
    %705 = vmatpush1.xpose.msra.mxu0 0.0
    %706 = vmatprep.subr.mxu0 0.0
    %707 = vmatpush1.xpose.msra.mxu0 0.0
    %708 = vmatprep.subr.mxu0 0.0
    %709 = vmatpush1.xpose.msra.mxu0 0.0
    %710 = vmatprep.subr.mxu0 0.0
    %711 = vmatpush1.xpose.msra.mxu0 0.0
    %712 = vmatprep.subr.mxu0 0.0
    %713 = vmatpush1.xpose.msra.mxu0 0.0
    %714 = vmatprep.subr.mxu0 0.0
    %715 = vmatpush1.xpose.msra.mxu0 0.0
    %716 = vmatprep.subr.mxu0 0.0
    %717 = vmatpush1.xpose.msra.mxu0 0.0
    %718 = vmatprep.subr.mxu0 0.0
    %719 = vmatpush1.xpose.msra.mxu0 0.0
    %720 = vmatprep.subr.mxu0 0.0
    %721 = vmatpush1.xpose.msra.mxu0 0.0
    %722 = vmatprep.subr.mxu0 0.0
    %723 = vmatpush1.xpose.msra.mxu0 0.0
    %724 = vmatprep.subr.mxu0 0.0
    %725 = vmatpush1.xpose.msra.mxu0 0.0
    %726 = vmatprep.subr.mxu0 0.0
    %727 = vmatpush1.xpose.msra.mxu0 0.0
    %728 = vmatprep.subr.mxu0 0.0
    %729 = vmatpush1.xpose.msra.mxu0 0.0
    %730 = vmatprep.subr.mxu0 0.0
    %731 = vmatpush1.xpose.msra.mxu0 0.0
    %732 = vmatprep.subr.mxu0 0.0
    %733 = vmatpush1.xpose.msra.mxu0 0.0
    %734 = vmatprep.subr.mxu0 0.0
    %735 = vmatpush1.xpose.msra.mxu0 0.0
    %736 = vmatprep.subr.mxu0 0.0
    %737 = vmatpush1.xpose.msra.mxu0 0.0
    %738 = vmatprep.subr.mxu0 0.0
    %739 = vmatpush1.xpose.msra.mxu0 0.0
    %740 = vmatprep.subr.mxu0 0.0
    %741 = vmatpush1.xpose.msra.mxu0 0.0
    %742 = vmatprep.subr.mxu0 0.0
    %743 = vmatpush1.xpose.msra.mxu0 0.0
    %744 = vmatprep.subr.mxu0 0.0
    %745 = vmatpush1.xpose.msra.mxu0 0.0
    %746 = vmatprep.subr.mxu0 0.0
    %747 = vmatpush1.xpose.msra.mxu0 0.0
    %748 = vmatprep.subr.mxu0 0.0
    %749 = vmatpush1.xpose.msra.mxu0 0.0
    %750 = vmatprep.subr.mxu0 0.0
    %751 = vmatpush1.xpose.msra.mxu0 0.0
    %752 = vmatprep.subr.mxu0 0.0
    %753 = vmatpush1.xpose.msra.mxu0 0.0
    %754 = vmatprep.subr.mxu0 0.0
    %755 = vmatpush1.xpose.msra.mxu0 0.0
    %756 = vmatprep.subr.mxu0 0.0
    %757 = vmatpush1.xpose.msra.mxu0 0.0
    %758 = vmatprep.subr.mxu0 0.0
    %759 = vmatpush1.xpose.msra.mxu0 0.0
    %760 = vmatprep.subr.mxu0 0.0
    %761 = vmatpush1.xpose.msra.mxu0 0.0
    %762 = vmatprep.subr.mxu0 0.0
    %763 = vmatpush1.xpose.msra.mxu0 0.0
    %764 = vmatprep.subr.mxu0 0.0
    %765 = vmatpush1.xpose.msra.mxu0 0.0
    %766 = vmatprep.mubr.f32.mxu0 0.0
    %v767 = vand.u32 %v93, 4294901760
    %v768 = vsub.f32 %v93, %v767
    %769 = vmatmul.mubr.f32.gmra.mrb[0].mxu0 %v768
    %v770 = vpop.f32.mrb[0].mxu0
    %v771 = vadd.f32 %v697, %v770
    %v772 = vpop.f32.mrb[0].mxu0
    %773 = vdwg.mxu0
    %774 = vmatprep.subr.mxu0 0.0
    %v775 = vand.u32 %v546, 4294901760
    %776 = vmatpush1.xpose.msra.mxu0 %v775
    %777 = vmatprep.subr.mxu0 0.0
    %778 = vmatpush1.xpose.msra.mxu0 0.0
    %779 = vmatprep.subr.mxu0 0.0
    %780 = vmatpush1.xpose.msra.mxu0 0.0
    %781 = vmatprep.subr.mxu0 0.0
    %782 = vmatpush1.xpose.msra.mxu0 0.0
    %783 = vmatprep.subr.mxu0 0.0
    %784 = vmatpush1.xpose.msra.mxu0 0.0
    %785 = vmatprep.subr.mxu0 0.0
    %786 = vmatpush1.xpose.msra.mxu0 0.0
    %787 = vmatprep.subr.mxu0 0.0
    %788 = vmatpush1.xpose.msra.mxu0 0.0
    %789 = vmatprep.subr.mxu0 0.0
    %790 = vmatpush1.xpose.msra.mxu0 0.0
    %791 = vmatprep.subr.mxu0 0.0
    %792 = vmatpush1.xpose.msra.mxu0 0.0
    %793 = vmatprep.subr.mxu0 0.0
    %794 = vmatpush1.xpose.msra.mxu0 0.0
    %795 = vmatprep.subr.mxu0 0.0
    %796 = vmatpush1.xpose.msra.mxu0 0.0
    %797 = vmatprep.subr.mxu0 0.0
    %798 = vmatpush1.xpose.msra.mxu0 0.0
    %799 = vmatprep.subr.mxu0 0.0
    %800 = vmatpush1.xpose.msra.mxu0 0.0
    %801 = vmatprep.subr.mxu0 0.0
    %802 = vmatpush1.xpose.msra.mxu0 0.0
    %803 = vmatprep.subr.mxu0 0.0
    %804 = vmatpush1.xpose.msra.mxu0 0.0
    %805 = vmatprep.subr.mxu0 0.0
    %806 = vmatpush1.xpose.msra.mxu0 0.0
    %807 = vmatprep.subr.mxu0 0.0
    %808 = vmatpush1.xpose.msra.mxu0 0.0
    %809 = vmatprep.subr.mxu0 0.0
    %810 = vmatpush1.xpose.msra.mxu0 0.0
    %811 = vmatprep.subr.mxu0 0.0
    %812 = vmatpush1.xpose.msra.mxu0 0.0
    %813 = vmatprep.subr.mxu0 0.0
    %814 = vmatpush1.xpose.msra.mxu0 0.0
    %815 = vmatprep.subr.mxu0 0.0
    %816 = vmatpush1.xpose.msra.mxu0 0.0
    %817 = vmatprep.subr.mxu0 0.0
    %818 = vmatpush1.xpose.msra.mxu0 0.0
    %819 = vmatprep.subr.mxu0 0.0
    %820 = vmatpush1.xpose.msra.mxu0 0.0
    %821 = vmatprep.subr.mxu0 0.0
    %822 = vmatpush1.xpose.msra.mxu0 0.0
    %823 = vmatprep.subr.mxu0 0.0
    %824 = vmatpush1.xpose.msra.mxu0 0.0
    %825 = vmatprep.subr.mxu0 0.0
    %826 = vmatpush1.xpose.msra.mxu0 0.0
    %827 = vmatprep.subr.mxu0 0.0
    %828 = vmatpush1.xpose.msra.mxu0 0.0
    %829 = vmatprep.subr.mxu0 0.0
    %830 = vmatpush1.xpose.msra.mxu0 0.0
    %831 = vmatprep.subr.mxu0 0.0
    %832 = vmatpush1.xpose.msra.mxu0 0.0
    %833 = vmatprep.subr.mxu0 0.0
    %834 = vmatpush1.xpose.msra.mxu0 0.0
    %835 = vmatprep.subr.mxu0 0.0
    %836 = vmatpush1.xpose.msra.mxu0 0.0
    %837 = vmatprep.subr.mxu0 0.0
    %838 = vmatpush1.xpose.msra.mxu0 0.0
    %839 = vmatprep.mubr.f32.mxu0 0.0
    %v840 = vand.u32 %v93, 4294901760
    %v841 = vsub.f32 %v93, %v840
    %v842 = vand.u32 %v841, 4294901760
    %843 = vmatmul.mubr.f32.gmra.mrb[0].mxu0 %v842
    %v844 = vpop.f32.mrb[0].mxu0
    %v845 = vadd.f32 %v771, %v844
    %v846 = vpop.f32.mrb[0].mxu0
    %847 = vdwg.mxu0
    %848 = vmatprep.subr.mxu0 0.0
    %v849 = vand.u32 %v546, 4294901760
    %v850 = vsub.f32 %v546, %v849
    %v851 = vand.u32 %v850, 4294901760
    %852 = vmatpush1.xpose.msra.mxu0 %v851
    %853 = vmatprep.subr.mxu0 0.0
    %854 = vmatpush1.xpose.msra.mxu0 0.0
    %855 = vmatprep.subr.mxu0 0.0
    %856 = vmatpush1.xpose.msra.mxu0 0.0
    %857 = vmatprep.subr.mxu0 0.0
    %858 = vmatpush1.xpose.msra.mxu0 0.0
    %859 = vmatprep.subr.mxu0 0.0
    %860 = vmatpush1.xpose.msra.mxu0 0.0
    %861 = vmatprep.subr.mxu0 0.0
    %862 = vmatpush1.xpose.msra.mxu0 0.0
    %863 = vmatprep.subr.mxu0 0.0
    %864 = vmatpush1.xpose.msra.mxu0 0.0
    %865 = vmatprep.subr.mxu0 0.0
    %866 = vmatpush1.xpose.msra.mxu0 0.0
    %867 = vmatprep.subr.mxu0 0.0
    %868 = vmatpush1.xpose.msra.mxu0 0.0
    %869 = vmatprep.subr.mxu0 0.0
    %870 = vmatpush1.xpose.msra.mxu0 0.0
    %871 = vmatprep.subr.mxu0 0.0
    %872 = vmatpush1.xpose.msra.mxu0 0.0
    %873 = vmatprep.subr.mxu0 0.0
    %874 = vmatpush1.xpose.msra.mxu0 0.0
    %875 = vmatprep.subr.mxu0 0.0
    %876 = vmatpush1.xpose.msra.mxu0 0.0
    %877 = vmatprep.subr.mxu0 0.0
    %878 = vmatpush1.xpose.msra.mxu0 0.0
    %879 = vmatprep.subr.mxu0 0.0
    %880 = vmatpush1.xpose.msra.mxu0 0.0
    %881 = vmatprep.subr.mxu0 0.0
    %882 = vmatpush1.xpose.msra.mxu0 0.0
    %883 = vmatprep.subr.mxu0 0.0
    %884 = vmatpush1.xpose.msra.mxu0 0.0
    %885 = vmatprep.subr.mxu0 0.0
    %886 = vmatpush1.xpose.msra.mxu0 0.0
    %887 = vmatprep.subr.mxu0 0.0
    %888 = vmatpush1.xpose.msra.mxu0 0.0
    %889 = vmatprep.subr.mxu0 0.0
    %890 = vmatpush1.xpose.msra.mxu0 0.0
    %891 = vmatprep.subr.mxu0 0.0
    %892 = vmatpush1.xpose.msra.mxu0 0.0
    %893 = vmatprep.subr.mxu0 0.0
    %894 = vmatpush1.xpose.msra.mxu0 0.0
    %895 = vmatprep.subr.mxu0 0.0
    %896 = vmatpush1.xpose.msra.mxu0 0.0
    %897 = vmatprep.subr.mxu0 0.0
    %898 = vmatpush1.xpose.msra.mxu0 0.0
    %899 = vmatprep.subr.mxu0 0.0
    %900 = vmatpush1.xpose.msra.mxu0 0.0
    %901 = vmatprep.subr.mxu0 0.0
    %902 = vmatpush1.xpose.msra.mxu0 0.0
    %903 = vmatprep.subr.mxu0 0.0
    %904 = vmatpush1.xpose.msra.mxu0 0.0
    %905 = vmatprep.subr.mxu0 0.0
    %906 = vmatpush1.xpose.msra.mxu0 0.0
    %907 = vmatprep.subr.mxu0 0.0
    %908 = vmatpush1.xpose.msra.mxu0 0.0
    %909 = vmatprep.subr.mxu0 0.0
    %910 = vmatpush1.xpose.msra.mxu0 0.0
    %911 = vmatprep.subr.mxu0 0.0
    %912 = vmatpush1.xpose.msra.mxu0 0.0
    %913 = vmatprep.subr.mxu0 0.0
    %914 = vmatpush1.xpose.msra.mxu0 0.0
    %915 = vmatprep.mubr.f32.mxu0 0.0
    %v916 = vand.u32 %v93, 4294901760
    %917 = vmatmul.mubr.f32.gmra.mrb[0].mxu0 %v916
    %v918 = vpop.f32.mrb[0].mxu0
    %v919 = vadd.f32 %v845, %v918
    %v920 = vpop.f32.mrb[0].mxu0
    %921 = vdwg.mxu0
    %922 = vmatprep.subr.mxu0 0.0
    %v923 = vand.u32 %v546, 4294901760
    %924 = vmatpush1.xpose.msra.mxu0 %v923
    %925 = vmatprep.subr.mxu0 0.0
    %926 = vmatpush1.xpose.msra.mxu0 0.0
    %927 = vmatprep.subr.mxu0 0.0
    %928 = vmatpush1.xpose.msra.mxu0 0.0
    %929 = vmatprep.subr.mxu0 0.0
    %930 = vmatpush1.xpose.msra.mxu0 0.0
    %931 = vmatprep.subr.mxu0 0.0
    %932 = vmatpush1.xpose.msra.mxu0 0.0
    %933 = vmatprep.subr.mxu0 0.0
    %934 = vmatpush1.xpose.msra.mxu0 0.0
    %935 = vmatprep.subr.mxu0 0.0
    %936 = vmatpush1.xpose.msra.mxu0 0.0
    %937 = vmatprep.subr.mxu0 0.0
    %938 = vmatpush1.xpose.msra.mxu0 0.0
    %939 = vmatprep.subr.mxu0 0.0
    %940 = vmatpush1.xpose.msra.mxu0 0.0
    %941 = vmatprep.subr.mxu0 0.0
    %942 = vmatpush1.xpose.msra.mxu0 0.0
    %943 = vmatprep.subr.mxu0 0.0
    %944 = vmatpush1.xpose.msra.mxu0 0.0
    %945 = vmatprep.subr.mxu0 0.0
    %946 = vmatpush1.xpose.msra.mxu0 0.0
    %947 = vmatprep.subr.mxu0 0.0
    %948 = vmatpush1.xpose.msra.mxu0 0.0
    %949 = vmatprep.subr.mxu0 0.0
    %950 = vmatpush1.xpose.msra.mxu0 0.0
    %951 = vmatprep.subr.mxu0 0.0
    %952 = vmatpush1.xpose.msra.mxu0 0.0
    %953 = vmatprep.subr.mxu0 0.0
    %954 = vmatpush1.xpose.msra.mxu0 0.0
    %955 = vmatprep.subr.mxu0 0.0
    %956 = vmatpush1.xpose.msra.mxu0 0.0
    %957 = vmatprep.subr.mxu0 0.0
    %958 = vmatpush1.xpose.msra.mxu0 0.0
    %959 = vmatprep.subr.mxu0 0.0
    %960 = vmatpush1.xpose.msra.mxu0 0.0
    %961 = vmatprep.subr.mxu0 0.0
    %962 = vmatpush1.xpose.msra.mxu0 0.0
    %963 = vmatprep.subr.mxu0 0.0
    %964 = vmatpush1.xpose.msra.mxu0 0.0
    %965 = vmatprep.subr.mxu0 0.0
    %966 = vmatpush1.xpose.msra.mxu0 0.0
    %967 = vmatprep.subr.mxu0 0.0
    %968 = vmatpush1.xpose.msra.mxu0 0.0
    %969 = vmatprep.subr.mxu0 0.0
    %970 = vmatpush1.xpose.msra.mxu0 0.0
    %971 = vmatprep.subr.mxu0 0.0
    %972 = vmatpush1.xpose.msra.mxu0 0.0
    %973 = vmatprep.subr.mxu0 0.0
    %974 = vmatpush1.xpose.msra.mxu0 0.0
    %975 = vmatprep.subr.mxu0 0.0
    %976 = vmatpush1.xpose.msra.mxu0 0.0
    %977 = vmatprep.subr.mxu0 0.0
    %978 = vmatpush1.xpose.msra.mxu0 0.0
    %979 = vmatprep.subr.mxu0 0.0
    %980 = vmatpush1.xpose.msra.mxu0 0.0
    %981 = vmatprep.subr.mxu0 0.0
    %982 = vmatpush1.xpose.msra.mxu0 0.0
    %983 = vmatprep.subr.mxu0 0.0
    %984 = vmatpush1.xpose.msra.mxu0 0.0
    %985 = vmatprep.subr.mxu0 0.0
    %986 = vmatpush1.xpose.msra.mxu0 0.0
    %987 = vmatprep.mubr.f32.mxu0 0.0
    %v988 = vand.u32 %v93, 4294901760
    %989 = vmatmul.mubr.f32.gmra.mrb[0].mxu0 %v988
    %v990 = vpop.f32.mrb[0].mxu0
    %v991 = vadd.f32 %v919, %v990
    %v992 = vpop.f32.mrb[0].mxu0
    %993 = vdwg.mxu0
    %v994 = vmul.f32 %v991, 2.0
    %v995 = vsel %vm89, -1e+30, %v544
    %v996 = vld [vmem:[#allocation2] sm:$0xff]
    %v997 = vmax.f32 %v995, %v994
    %vm998 = vcmask 64512
    %v999 = vsel %vm998, %v997, -inf
    %1000 = vmax.xlane.f32.xlu0 %v999
    %v1001 = vpop.xlane.xlu0 %1000
    %v1002 = vmax.f32 %v996, %v1001
    %1004 = vset.pattern.permute.xlu0 0
    %1005 = vperm.xlu0 %1004, %v1002
    %v1006 = vpop.permute.xlu0 %1005
    %v1008 = vsub.f32 %v995, %v1006
    %v1009 = vmul.f32 %v1008, 1.442695
    %v1010 = vpow.pop %v1009
    %v1011 = vsub.f32 %v994, %v1006
    %v1012 = vmul.f32 %v1011, 1.442695
    %v1013 = vpow.pop %v1012
    %v1014 = vadd.f32 %v1010, %v1013
    %v1015 = vsub.f32 %v996, %v1002
    %v1016 = vmul.f32 %v1015, 1.442695
    %v1017 = vpow.pop %v1016
    %v1018 = vld [vmem:[#allocation3] sm:$0xff]
    %v1019 = vmul.f32 %v1017, %v1018
    %v1020 = vsel %vm998, %v1014, 0.0
    %1021 = vadd.xlane.f32.xlu0 %v1020
    %v1022 = vpop.xlane.xlu0 %1021
    %v1023 = vadd.f32 %v1019, %v1022
    %vm1024 = vcmask 7168
    %1025 = vst.msk [vmem:[#allocation3] sm:$0xff] %vm1024, %v1023
    %1026 = vst.msk [vmem:[#allocation2] sm:$0xff] %vm1024, %v1002
    %v1027 = vld [vmem:[#allocation9] sm:$0xff]
    %v1029 = vsel %vm91, %v1027, 0
    %1031 = vmatprep.subr.mxu0 0.0
    %v1032 = vand.u32 %v546, 4294901760
    %1033 = vmatpush1.xpose.msra.mxu0 %v1032
    %1034 = vmatprep.subr.mxu0 0.0
    %1035 = vmatpush1.xpose.msra.mxu0 0.0
    %1036 = vmatprep.subr.mxu0 0.0
    %1037 = vmatpush1.xpose.msra.mxu0 0.0
    %1038 = vmatprep.subr.mxu0 0.0
    %1039 = vmatpush1.xpose.msra.mxu0 0.0
    %1040 = vmatprep.subr.mxu0 0.0
    %1041 = vmatpush1.xpose.msra.mxu0 0.0
    %1042 = vmatprep.subr.mxu0 0.0
    %1043 = vmatpush1.xpose.msra.mxu0 0.0
    %1044 = vmatprep.subr.mxu0 0.0
    %1045 = vmatpush1.xpose.msra.mxu0 0.0
    %1046 = vmatprep.subr.mxu0 0.0
    %1047 = vmatpush1.xpose.msra.mxu0 0.0
    %1048 = vmatprep.subr.mxu0 0.0
    %1049 = vmatpush1.xpose.msra.mxu0 0.0
    %1050 = vmatprep.subr.mxu0 0.0
    %1051 = vmatpush1.xpose.msra.mxu0 0.0
    %1052 = vmatprep.subr.mxu0 0.0
    %1053 = vmatpush1.xpose.msra.mxu0 0.0
    %1054 = vmatprep.subr.mxu0 0.0
    %1055 = vmatpush1.xpose.msra.mxu0 0.0
    %1056 = vmatprep.subr.mxu0 0.0
    %1057 = vmatpush1.xpose.msra.mxu0 0.0
    %1058 = vmatprep.subr.mxu0 0.0
    %1059 = vmatpush1.xpose.msra.mxu0 0.0
    %1060 = vmatprep.subr.mxu0 0.0
    %1061 = vmatpush1.xpose.msra.mxu0 0.0
    %1062 = vmatprep.subr.mxu0 0.0
    %1063 = vmatpush1.xpose.msra.mxu0 0.0
    %1064 = vmatprep.subr.mxu0 0.0
    %1065 = vmatpush1.xpose.msra.mxu0 0.0
    %1066 = vmatprep.subr.mxu0 0.0
    %1067 = vmatpush1.xpose.msra.mxu0 0.0
    %1068 = vmatprep.subr.mxu0 0.0
    %1069 = vmatpush1.xpose.msra.mxu0 0.0
    %1070 = vmatprep.subr.mxu0 0.0
    %1071 = vmatpush1.xpose.msra.mxu0 0.0
    %1072 = vmatprep.subr.mxu0 0.0
    %1073 = vmatpush1.xpose.msra.mxu0 0.0
    %1074 = vmatprep.subr.mxu0 0.0
    %1075 = vmatpush1.xpose.msra.mxu0 0.0
    %1076 = vmatprep.subr.mxu0 0.0
    %1077 = vmatpush1.xpose.msra.mxu0 0.0
    %1078 = vmatprep.subr.mxu0 0.0
    %1079 = vmatpush1.xpose.msra.mxu0 0.0
    %1080 = vmatprep.subr.mxu0 0.0
    %1081 = vmatpush1.xpose.msra.mxu0 0.0
    %1082 = vmatprep.subr.mxu0 0.0
    %1083 = vmatpush1.xpose.msra.mxu0 0.0
    %1084 = vmatprep.subr.mxu0 0.0
    %1085 = vmatpush1.xpose.msra.mxu0 0.0
    %1086 = vmatprep.subr.mxu0 0.0
    %1087 = vmatpush1.xpose.msra.mxu0 0.0
    %1088 = vmatprep.subr.mxu0 0.0
    %1089 = vmatpush1.xpose.msra.mxu0 0.0
    %1090 = vmatprep.subr.mxu0 0.0
    %1091 = vmatpush1.xpose.msra.mxu0 0.0
    %1092 = vmatprep.subr.mxu0 0.0
    %1093 = vmatpush1.xpose.msra.mxu0 0.0
    %1094 = vmatprep.subr.mxu0 0.0
    %1095 = vmatpush1.xpose.msra.mxu0 0.0
    %1096 = vmatprep.mubr.f32.mxu0 0.0
    %v1097 = vand.u32 %v1029, 4294901760
    %v1098 = vsub.f32 %v1029, %v1097
    %v1099 = vand.u32 %v1098, 4294901760
    %v1100 = vsub.f32 %v1098, %v1099
    %v1101 = vand.u32 %v1100, 4294901760
    %1102 = vmatmul.mubr.f32.gmra.mrb[0].mxu0 %v1101
    %v1103 = vpop.f32.mrb[0].mxu0
    %v1104 = vadd.f32 0.0, %v1103
    %v1105 = vpop.f32.mrb[0].mxu0
    %1106 = vdwg.mxu0
    %1107 = vmatprep.subr.mxu0 0.0
    %v1108 = vand.u32 %v546, 4294901760
    %v1109 = vsub.f32 %v546, %v1108
    %v1110 = vand.u32 %v1109, 4294901760
    %v1111 = vsub.f32 %v1109, %v1110
    %v1112 = vand.u32 %v1111, 4294901760
    %1113 = vmatpush1.xpose.msra.mxu0 %v1112
    %1114 = vmatprep.subr.mxu0 0.0
    %1115 = vmatpush1.xpose.msra.mxu0 0.0
    %1116 = vmatprep.subr.mxu0 0.0
    %1117 = vmatpush1.xpose.msra.mxu0 0.0
    %1118 = vmatprep.subr.mxu0 0.0
    %1119 = vmatpush1.xpose.msra.mxu0 0.0
    %1120 = vmatprep.subr.mxu0 0.0
    %1121 = vmatpush1.xpose.msra.mxu0 0.0
    %1122 = vmatprep.subr.mxu0 0.0
    %1123 = vmatpush1.xpose.msra.mxu0 0.0
    %1124 = vmatprep.subr.mxu0 0.0
    %1125 = vmatpush1.xpose.msra.mxu0 0.0
    %1126 = vmatprep.subr.mxu0 0.0
    %1127 = vmatpush1.xpose.msra.mxu0 0.0
    %1128 = vmatprep.subr.mxu0 0.0
    %1129 = vmatpush1.xpose.msra.mxu0 0.0
    %1130 = vmatprep.subr.mxu0 0.0
    %1131 = vmatpush1.xpose.msra.mxu0 0.0
    %1132 = vmatprep.subr.mxu0 0.0
    %1133 = vmatpush1.xpose.msra.mxu0 0.0
    %1134 = vmatprep.subr.mxu0 0.0
    %1135 = vmatpush1.xpose.msra.mxu0 0.0
    %1136 = vmatprep.subr.mxu0 0.0
    %1137 = vmatpush1.xpose.msra.mxu0 0.0
    %1138 = vmatprep.subr.mxu0 0.0
    %1139 = vmatpush1.xpose.msra.mxu0 0.0
    %1140 = vmatprep.subr.mxu0 0.0
    %1141 = vmatpush1.xpose.msra.mxu0 0.0
    %1142 = vmatprep.subr.mxu0 0.0
    %1143 = vmatpush1.xpose.msra.mxu0 0.0
    %1144 = vmatprep.subr.mxu0 0.0
    %1145 = vmatpush1.xpose.msra.mxu0 0.0
    %1146 = vmatprep.subr.mxu0 0.0
    %1147 = vmatpush1.xpose.msra.mxu0 0.0
    %1148 = vmatprep.subr.mxu0 0.0
    %1149 = vmatpush1.xpose.msra.mxu0 0.0
    %1150 = vmatprep.subr.mxu0 0.0
    %1151 = vmatpush1.xpose.msra.mxu0 0.0
    %1152 = vmatprep.subr.mxu0 0.0
    %1153 = vmatpush1.xpose.msra.mxu0 0.0
    %1154 = vmatprep.subr.mxu0 0.0
    %1155 = vmatpush1.xpose.msra.mxu0 0.0
    %1156 = vmatprep.subr.mxu0 0.0
    %1157 = vmatpush1.xpose.msra.mxu0 0.0
    %1158 = vmatprep.subr.mxu0 0.0
    %1159 = vmatpush1.xpose.msra.mxu0 0.0
    %1160 = vmatprep.subr.mxu0 0.0
    %1161 = vmatpush1.xpose.msra.mxu0 0.0
    %1162 = vmatprep.subr.mxu0 0.0
    %1163 = vmatpush1.xpose.msra.mxu0 0.0
    %1164 = vmatprep.subr.mxu0 0.0
    %1165 = vmatpush1.xpose.msra.mxu0 0.0
    %1166 = vmatprep.subr.mxu0 0.0
    %1167 = vmatpush1.xpose.msra.mxu0 0.0
    %1168 = vmatprep.subr.mxu0 0.0
    %1169 = vmatpush1.xpose.msra.mxu0 0.0
    %1170 = vmatprep.subr.mxu0 0.0
    %1171 = vmatpush1.xpose.msra.mxu0 0.0
    %1172 = vmatprep.subr.mxu0 0.0
    %1173 = vmatpush1.xpose.msra.mxu0 0.0
    %1174 = vmatprep.subr.mxu0 0.0
    %1175 = vmatpush1.xpose.msra.mxu0 0.0
    %1176 = vmatprep.mubr.f32.mxu0 0.0
    %v1177 = vand.u32 %v1029, 4294901760
    %1178 = vmatmul.mubr.f32.gmra.mrb[0].mxu0 %v1177
    %v1179 = vpop.f32.mrb[0].mxu0
    %v1180 = vadd.f32 %v1104, %v1179
    %v1181 = vpop.f32.mrb[0].mxu0
    %1182 = vdwg.mxu0
    %1183 = vmatprep.subr.mxu0 0.0
    %v1184 = vand.u32 %v546, 4294901760
    %v1185 = vsub.f32 %v546, %v1184
    %1186 = vmatpush1.xpose.msra.mxu0 %v1185
    %1187 = vmatprep.subr.mxu0 0.0
    %1188 = vmatpush1.xpose.msra.mxu0 0.0
    %1189 = vmatprep.subr.mxu0 0.0
    %1190 = vmatpush1.xpose.msra.mxu0 0.0
    %1191 = vmatprep.subr.mxu0 0.0
    %1192 = vmatpush1.xpose.msra.mxu0 0.0
    %1193 = vmatprep.subr.mxu0 0.0
    %1194 = vmatpush1.xpose.msra.mxu0 0.0
    %1195 = vmatprep.subr.mxu0 0.0
    %1196 = vmatpush1.xpose.msra.mxu0 0.0
    %1197 = vmatprep.subr.mxu0 0.0
    %1198 = vmatpush1.xpose.msra.mxu0 0.0
    %1199 = vmatprep.subr.mxu0 0.0
    %1200 = vmatpush1.xpose.msra.mxu0 0.0
    %1201 = vmatprep.subr.mxu0 0.0
    %1202 = vmatpush1.xpose.msra.mxu0 0.0
    %1203 = vmatprep.subr.mxu0 0.0
    %1204 = vmatpush1.xpose.msra.mxu0 0.0
    %1205 = vmatprep.subr.mxu0 0.0
    %1206 = vmatpush1.xpose.msra.mxu0 0.0
    %1207 = vmatprep.subr.mxu0 0.0
    %1208 = vmatpush1.xpose.msra.mxu0 0.0
    %1209 = vmatprep.subr.mxu0 0.0
    %1210 = vmatpush1.xpose.msra.mxu0 0.0
    %1211 = vmatprep.subr.mxu0 0.0
    %1212 = vmatpush1.xpose.msra.mxu0 0.0
    %1213 = vmatprep.subr.mxu0 0.0
    %1214 = vmatpush1.xpose.msra.mxu0 0.0
    %1215 = vmatprep.subr.mxu0 0.0
    %1216 = vmatpush1.xpose.msra.mxu0 0.0
    %1217 = vmatprep.subr.mxu0 0.0
    %1218 = vmatpush1.xpose.msra.mxu0 0.0
    %1219 = vmatprep.subr.mxu0 0.0
    %1220 = vmatpush1.xpose.msra.mxu0 0.0
    %1221 = vmatprep.subr.mxu0 0.0
    %1222 = vmatpush1.xpose.msra.mxu0 0.0
    %1223 = vmatprep.subr.mxu0 0.0
    %1224 = vmatpush1.xpose.msra.mxu0 0.0
    %1225 = vmatprep.subr.mxu0 0.0
    %1226 = vmatpush1.xpose.msra.mxu0 0.0
    %1227 = vmatprep.subr.mxu0 0.0
    %1228 = vmatpush1.xpose.msra.mxu0 0.0
    %1229 = vmatprep.subr.mxu0 0.0
    %1230 = vmatpush1.xpose.msra.mxu0 0.0
    %1231 = vmatprep.subr.mxu0 0.0
    %1232 = vmatpush1.xpose.msra.mxu0 0.0
    %1233 = vmatprep.subr.mxu0 0.0
    %1234 = vmatpush1.xpose.msra.mxu0 0.0
    %1235 = vmatprep.subr.mxu0 0.0
    %1236 = vmatpush1.xpose.msra.mxu0 0.0
    %1237 = vmatprep.subr.mxu0 0.0
    %1238 = vmatpush1.xpose.msra.mxu0 0.0
    %1239 = vmatprep.subr.mxu0 0.0
    %1240 = vmatpush1.xpose.msra.mxu0 0.0
    %1241 = vmatprep.subr.mxu0 0.0
    %1242 = vmatpush1.xpose.msra.mxu0 0.0
    %1243 = vmatprep.subr.mxu0 0.0
    %1244 = vmatpush1.xpose.msra.mxu0 0.0
    %1245 = vmatprep.subr.mxu0 0.0
    %1246 = vmatpush1.xpose.msra.mxu0 0.0
    %1247 = vmatprep.subr.mxu0 0.0
    %1248 = vmatpush1.xpose.msra.mxu0 0.0
    %1249 = vmatprep.mubr.f32.mxu0 0.0
    %v1250 = vand.u32 %v1029, 4294901760
    %v1251 = vsub.f32 %v1029, %v1250
    %1252 = vmatmul.mubr.f32.gmra.mrb[0].mxu0 %v1251
    %v1253 = vpop.f32.mrb[0].mxu0
    %v1254 = vadd.f32 %v1180, %v1253
    %v1255 = vpop.f32.mrb[0].mxu0
    %1256 = vdwg.mxu0
    %1257 = vmatprep.subr.mxu0 0.0
    %v1258 = vand.u32 %v546, 4294901760
    %1259 = vmatpush1.xpose.msra.mxu0 %v1258
    %1260 = vmatprep.subr.mxu0 0.0
    %1261 = vmatpush1.xpose.msra.mxu0 0.0
    %1262 = vmatprep.subr.mxu0 0.0
    %1263 = vmatpush1.xpose.msra.mxu0 0.0
    %1264 = vmatprep.subr.mxu0 0.0
    %1265 = vmatpush1.xpose.msra.mxu0 0.0
    %1266 = vmatprep.subr.mxu0 0.0
    %1267 = vmatpush1.xpose.msra.mxu0 0.0
    %1268 = vmatprep.subr.mxu0 0.0
    %1269 = vmatpush1.xpose.msra.mxu0 0.0
    %1270 = vmatprep.subr.mxu0 0.0
    %1271 = vmatpush1.xpose.msra.mxu0 0.0
    %1272 = vmatprep.subr.mxu0 0.0
    %1273 = vmatpush1.xpose.msra.mxu0 0.0
    %1274 = vmatprep.subr.mxu0 0.0
    %1275 = vmatpush1.xpose.msra.mxu0 0.0
    %1276 = vmatprep.subr.mxu0 0.0
    %1277 = vmatpush1.xpose.msra.mxu0 0.0
    %1278 = vmatprep.subr.mxu0 0.0
    %1279 = vmatpush1.xpose.msra.mxu0 0.0
    %1280 = vmatprep.subr.mxu0 0.0
    %1281 = vmatpush1.xpose.msra.mxu0 0.0
    %1282 = vmatprep.subr.mxu0 0.0
    %1283 = vmatpush1.xpose.msra.mxu0 0.0
    %1284 = vmatprep.subr.mxu0 0.0
    %1285 = vmatpush1.xpose.msra.mxu0 0.0
    %1286 = vmatprep.subr.mxu0 0.0
    %1287 = vmatpush1.xpose.msra.mxu0 0.0
    %1288 = vmatprep.subr.mxu0 0.0
    %1289 = vmatpush1.xpose.msra.mxu0 0.0
    %1290 = vmatprep.subr.mxu0 0.0
    %1291 = vmatpush1.xpose.msra.mxu0 0.0
    %1292 = vmatprep.subr.mxu0 0.0
    %1293 = vmatpush1.xpose.msra.mxu0 0.0
    %1294 = vmatprep.subr.mxu0 0.0
    %1295 = vmatpush1.xpose.msra.mxu0 0.0
    %1296 = vmatprep.subr.mxu0 0.0
    %1297 = vmatpush1.xpose.msra.mxu0 0.0
    %1298 = vmatprep.subr.mxu0 0.0
    %1299 = vmatpush1.xpose.msra.mxu0 0.0
    %1300 = vmatprep.subr.mxu0 0.0
    %1301 = vmatpush1.xpose.msra.mxu0 0.0
    %1302 = vmatprep.subr.mxu0 0.0
    %1303 = vmatpush1.xpose.msra.mxu0 0.0
    %1304 = vmatprep.subr.mxu0 0.0
    %1305 = vmatpush1.xpose.msra.mxu0 0.0
    %1306 = vmatprep.subr.mxu0 0.0
    %1307 = vmatpush1.xpose.msra.mxu0 0.0
    %1308 = vmatprep.subr.mxu0 0.0
    %1309 = vmatpush1.xpose.msra.mxu0 0.0
    %1310 = vmatprep.subr.mxu0 0.0
    %1311 = vmatpush1.xpose.msra.mxu0 0.0
    %1312 = vmatprep.subr.mxu0 0.0
    %1313 = vmatpush1.xpose.msra.mxu0 0.0
    %1314 = vmatprep.subr.mxu0 0.0
    %1315 = vmatpush1.xpose.msra.mxu0 0.0
    %1316 = vmatprep.subr.mxu0 0.0
    %1317 = vmatpush1.xpose.msra.mxu0 0.0
    %1318 = vmatprep.subr.mxu0 0.0
    %1319 = vmatpush1.xpose.msra.mxu0 0.0
    %1320 = vmatprep.subr.mxu0 0.0
    %1321 = vmatpush1.xpose.msra.mxu0 0.0
    %1322 = vmatprep.mubr.f32.mxu0 0.0
    %v1323 = vand.u32 %v1029, 4294901760
    %v1324 = vsub.f32 %v1029, %v1323
    %v1325 = vand.u32 %v1324, 4294901760
    %1326 = vmatmul.mubr.f32.gmra.mrb[0].mxu0 %v1325
    %v1327 = vpop.f32.mrb[0].mxu0
    %v1328 = vadd.f32 %v1254, %v1327
    %v1329 = vpop.f32.mrb[0].mxu0
    %1330 = vdwg.mxu0
    %1331 = vmatprep.subr.mxu0 0.0
    %v1332 = vand.u32 %v546, 4294901760
    %v1333 = vsub.f32 %v546, %v1332
    %v1334 = vand.u32 %v1333, 4294901760
    %1335 = vmatpush1.xpose.msra.mxu0 %v1334
    %1336 = vmatprep.subr.mxu0 0.0
    %1337 = vmatpush1.xpose.msra.mxu0 0.0
    %1338 = vmatprep.subr.mxu0 0.0
    %1339 = vmatpush1.xpose.msra.mxu0 0.0
    %1340 = vmatprep.subr.mxu0 0.0
    %1341 = vmatpush1.xpose.msra.mxu0 0.0
    %1342 = vmatprep.subr.mxu0 0.0
    %1343 = vmatpush1.xpose.msra.mxu0 0.0
    %1344 = vmatprep.subr.mxu0 0.0
    %1345 = vmatpush1.xpose.msra.mxu0 0.0
    %1346 = vmatprep.subr.mxu0 0.0
    %1347 = vmatpush1.xpose.msra.mxu0 0.0
    %1348 = vmatprep.subr.mxu0 0.0
    %1349 = vmatpush1.xpose.msra.mxu0 0.0
    %1350 = vmatprep.subr.mxu0 0.0
    %1351 = vmatpush1.xpose.msra.mxu0 0.0
    %1352 = vmatprep.subr.mxu0 0.0
    %1353 = vmatpush1.xpose.msra.mxu0 0.0
    %1354 = vmatprep.subr.mxu0 0.0
    %1355 = vmatpush1.xpose.msra.mxu0 0.0
    %1356 = vmatprep.subr.mxu0 0.0
    %1357 = vmatpush1.xpose.msra.mxu0 0.0
    %1358 = vmatprep.subr.mxu0 0.0
    %1359 = vmatpush1.xpose.msra.mxu0 0.0
    %1360 = vmatprep.subr.mxu0 0.0
    %1361 = vmatpush1.xpose.msra.mxu0 0.0
    %1362 = vmatprep.subr.mxu0 0.0
    %1363 = vmatpush1.xpose.msra.mxu0 0.0
    %1364 = vmatprep.subr.mxu0 0.0
    %1365 = vmatpush1.xpose.msra.mxu0 0.0
    %1366 = vmatprep.subr.mxu0 0.0
    %1367 = vmatpush1.xpose.msra.mxu0 0.0
    %1368 = vmatprep.subr.mxu0 0.0
    %1369 = vmatpush1.xpose.msra.mxu0 0.0
    %1370 = vmatprep.subr.mxu0 0.0
    %1371 = vmatpush1.xpose.msra.mxu0 0.0
    %1372 = vmatprep.subr.mxu0 0.0
    %1373 = vmatpush1.xpose.msra.mxu0 0.0
    %1374 = vmatprep.subr.mxu0 0.0
    %1375 = vmatpush1.xpose.msra.mxu0 0.0
    %1376 = vmatprep.subr.mxu0 0.0
    %1377 = vmatpush1.xpose.msra.mxu0 0.0
    %1378 = vmatprep.subr.mxu0 0.0
    %1379 = vmatpush1.xpose.msra.mxu0 0.0
    %1380 = vmatprep.subr.mxu0 0.0
    %1381 = vmatpush1.xpose.msra.mxu0 0.0
    %1382 = vmatprep.subr.mxu0 0.0
    %1383 = vmatpush1.xpose.msra.mxu0 0.0
    %1384 = vmatprep.subr.mxu0 0.0
    %1385 = vmatpush1.xpose.msra.mxu0 0.0
    %1386 = vmatprep.subr.mxu0 0.0
    %1387 = vmatpush1.xpose.msra.mxu0 0.0
    %1388 = vmatprep.subr.mxu0 0.0
    %1389 = vmatpush1.xpose.msra.mxu0 0.0
    %1390 = vmatprep.subr.mxu0 0.0
    %1391 = vmatpush1.xpose.msra.mxu0 0.0
    %1392 = vmatprep.subr.mxu0 0.0
    %1393 = vmatpush1.xpose.msra.mxu0 0.0
    %1394 = vmatprep.subr.mxu0 0.0
    %1395 = vmatpush1.xpose.msra.mxu0 0.0
    %1396 = vmatprep.subr.mxu0 0.0
    %1397 = vmatpush1.xpose.msra.mxu0 0.0
    %1398 = vmatprep.mubr.f32.mxu0 0.0
    %v1399 = vand.u32 %v1029, 4294901760
    %1400 = vmatmul.mubr.f32.gmra.mrb[0].mxu0 %v1399
    %v1401 = vpop.f32.mrb[0].mxu0
    %v1402 = vadd.f32 %v1328, %v1401
    %v1403 = vpop.f32.mrb[0].mxu0
    %1404 = vdwg.mxu0
    %1405 = vmatprep.subr.mxu0 0.0
    %v1406 = vand.u32 %v546, 4294901760
    %1407 = vmatpush1.xpose.msra.mxu0 %v1406
    %1408 = vmatprep.subr.mxu0 0.0
    %1409 = vmatpush1.xpose.msra.mxu0 0.0
    %1410 = vmatprep.subr.mxu0 0.0
    %1411 = vmatpush1.xpose.msra.mxu0 0.0
    %1412 = vmatprep.subr.mxu0 0.0
    %1413 = vmatpush1.xpose.msra.mxu0 0.0
    %1414 = vmatprep.subr.mxu0 0.0
    %1415 = vmatpush1.xpose.msra.mxu0 0.0
    %1416 = vmatprep.subr.mxu0 0.0
    %1417 = vmatpush1.xpose.msra.mxu0 0.0
    %1418 = vmatprep.subr.mxu0 0.0
    %1419 = vmatpush1.xpose.msra.mxu0 0.0
    %1420 = vmatprep.subr.mxu0 0.0
    %1421 = vmatpush1.xpose.msra.mxu0 0.0
    %1422 = vmatprep.subr.mxu0 0.0
    %1423 = vmatpush1.xpose.msra.mxu0 0.0
    %1424 = vmatprep.subr.mxu0 0.0
    %1425 = vmatpush1.xpose.msra.mxu0 0.0
    %1426 = vmatprep.subr.mxu0 0.0
    %1427 = vmatpush1.xpose.msra.mxu0 0.0
    %1428 = vmatprep.subr.mxu0 0.0
    %1429 = vmatpush1.xpose.msra.mxu0 0.0
    %1430 = vmatprep.subr.mxu0 0.0
    %1431 = vmatpush1.xpose.msra.mxu0 0.0
    %1432 = vmatprep.subr.mxu0 0.0
    %1433 = vmatpush1.xpose.msra.mxu0 0.0
    %1434 = vmatprep.subr.mxu0 0.0
    %1435 = vmatpush1.xpose.msra.mxu0 0.0
    %1436 = vmatprep.subr.mxu0 0.0
    %1437 = vmatpush1.xpose.msra.mxu0 0.0
    %1438 = vmatprep.subr.mxu0 0.0
    %1439 = vmatpush1.xpose.msra.mxu0 0.0
    %1440 = vmatprep.subr.mxu0 0.0
    %1441 = vmatpush1.xpose.msra.mxu0 0.0
    %1442 = vmatprep.subr.mxu0 0.0
    %1443 = vmatpush1.xpose.msra.mxu0 0.0
    %1444 = vmatprep.subr.mxu0 0.0
    %1445 = vmatpush1.xpose.msra.mxu0 0.0
    %1446 = vmatprep.subr.mxu0 0.0
    %1447 = vmatpush1.xpose.msra.mxu0 0.0
    %1448 = vmatprep.subr.mxu0 0.0
    %1449 = vmatpush1.xpose.msra.mxu0 0.0
    %1450 = vmatprep.subr.mxu0 0.0
    %1451 = vmatpush1.xpose.msra.mxu0 0.0
    %1452 = vmatprep.subr.mxu0 0.0
    %1453 = vmatpush1.xpose.msra.mxu0 0.0
    %1454 = vmatprep.subr.mxu0 0.0
    %1455 = vmatpush1.xpose.msra.mxu0 0.0
    %1456 = vmatprep.subr.mxu0 0.0
    %1457 = vmatpush1.xpose.msra.mxu0 0.0
    %1458 = vmatprep.subr.mxu0 0.0
    %1459 = vmatpush1.xpose.msra.mxu0 0.0
    %1460 = vmatprep.subr.mxu0 0.0
    %1461 = vmatpush1.xpose.msra.mxu0 0.0
    %1462 = vmatprep.subr.mxu0 0.0
    %1463 = vmatpush1.xpose.msra.mxu0 0.0
    %1464 = vmatprep.subr.mxu0 0.0
    %1465 = vmatpush1.xpose.msra.mxu0 0.0
    %1466 = vmatprep.subr.mxu0 0.0
    %1467 = vmatpush1.xpose.msra.mxu0 0.0
    %1468 = vmatprep.subr.mxu0 0.0
    %1469 = vmatpush1.xpose.msra.mxu0 0.0
    %1470 = vmatprep.mubr.f32.mxu0 0.0
    %v1471 = vand.u32 %v1029, 4294901760
    %1472 = vmatmul.mubr.f32.gmra.mrb[0].mxu0 %v1471
    %v1473 = vpop.f32.mrb[0].mxu0
    %v1474 = vadd.f32 %v1402, %v1473
    %v1475 = vpop.f32.mrb[0].mxu0
    %1476 = vdwg.mxu0
    %v1477 = vmul.f32 %v1474, 2.0
    %1478 = vmatprep.subr.mxu0 0.0
    %v1479 = vand.u32 %v96, 4294901760
    %1480 = vmatpush1.xpose.msra.mxu0 %v1479
    %1481 = vmatprep.subr.mxu0 0.0
    %1482 = vmatpush1.xpose.msra.mxu0 0.0
    %1483 = vmatprep.subr.mxu0 0.0
    %1484 = vmatpush1.xpose.msra.mxu0 0.0
    %1485 = vmatprep.subr.mxu0 0.0
    %1486 = vmatpush1.xpose.msra.mxu0 0.0
    %1487 = vmatprep.subr.mxu0 0.0
    %1488 = vmatpush1.xpose.msra.mxu0 0.0
    %1489 = vmatprep.subr.mxu0 0.0
    %1490 = vmatpush1.xpose.msra.mxu0 0.0
    %1491 = vmatprep.subr.mxu0 0.0
    %1492 = vmatpush1.xpose.msra.mxu0 0.0
    %1493 = vmatprep.subr.mxu0 0.0
    %1494 = vmatpush1.xpose.msra.mxu0 0.0
    %1495 = vmatprep.subr.mxu0 0.0
    %1496 = vmatpush1.xpose.msra.mxu0 0.0
    %1497 = vmatprep.subr.mxu0 0.0
    %1498 = vmatpush1.xpose.msra.mxu0 0.0
    %1499 = vmatprep.subr.mxu0 0.0
    %1500 = vmatpush1.xpose.msra.mxu0 0.0
    %1501 = vmatprep.subr.mxu0 0.0
    %1502 = vmatpush1.xpose.msra.mxu0 0.0
    %1503 = vmatprep.subr.mxu0 0.0
    %1504 = vmatpush1.xpose.msra.mxu0 0.0
    %1505 = vmatprep.subr.mxu0 0.0
    %1506 = vmatpush1.xpose.msra.mxu0 0.0
    %1507 = vmatprep.subr.mxu0 0.0
    %1508 = vmatpush1.xpose.msra.mxu0 0.0
    %1509 = vmatprep.subr.mxu0 0.0
    %1510 = vmatpush1.xpose.msra.mxu0 0.0
    %1511 = vmatprep.subr.mxu0 0.0
    %1512 = vmatpush1.xpose.msra.mxu0 0.0
    %1513 = vmatprep.subr.mxu0 0.0
    %1514 = vmatpush1.xpose.msra.mxu0 0.0
    %1515 = vmatprep.subr.mxu0 0.0
    %1516 = vmatpush1.xpose.msra.mxu0 0.0
    %1517 = vmatprep.subr.mxu0 0.0
    %1518 = vmatpush1.xpose.msra.mxu0 0.0
    %1519 = vmatprep.subr.mxu0 0.0
    %1520 = vmatpush1.xpose.msra.mxu0 0.0
    %1521 = vmatprep.subr.mxu0 0.0
    %1522 = vmatpush1.xpose.msra.mxu0 0.0
    %1523 = vmatprep.subr.mxu0 0.0
    %1524 = vmatpush1.xpose.msra.mxu0 0.0
    %1525 = vmatprep.subr.mxu0 0.0
    %1526 = vmatpush1.xpose.msra.mxu0 0.0
    %1527 = vmatprep.subr.mxu0 0.0
    %1528 = vmatpush1.xpose.msra.mxu0 0.0
    %1529 = vmatprep.subr.mxu0 0.0
    %1530 = vmatpush1.xpose.msra.mxu0 0.0
    %1531 = vmatprep.subr.mxu0 0.0
    %1532 = vmatpush1.xpose.msra.mxu0 0.0
    %1533 = vmatprep.subr.mxu0 0.0
    %1534 = vmatpush1.xpose.msra.mxu0 0.0
    %1535 = vmatprep.subr.mxu0 0.0
    %1536 = vmatpush1.xpose.msra.mxu0 0.0
    %1537 = vmatprep.subr.mxu0 0.0
    %1538 = vmatpush1.xpose.msra.mxu0 0.0
    %1539 = vmatprep.subr.mxu0 0.0
    %1540 = vmatpush1.xpose.msra.mxu0 0.0
    %1541 = vmatprep.subr.mxu0 0.0
    %1542 = vmatpush1.xpose.msra.mxu0 0.0
    %1543 = vmatprep.mubr.f32.mxu0 0.0
    %v1544 = vand.u32 %v1029, 4294901760
    %v1545 = vsub.f32 %v1029, %v1544
    %v1546 = vand.u32 %v1545, 4294901760
    %v1547 = vsub.f32 %v1545, %v1546
    %v1548 = vand.u32 %v1547, 4294901760
    %1549 = vmatmul.mubr.f32.gmra.mrb[0].mxu0 %v1548
    %v1550 = vpop.f32.mrb[0].mxu0
    %v1551 = vadd.f32 0.0, %v1550
    %v1552 = vpop.f32.mrb[0].mxu0
    %1553 = vdwg.mxu0
    %1554 = vmatprep.subr.mxu0 0.0
    %v1555 = vand.u32 %v96, 4294901760
    %v1556 = vsub.f32 %v96, %v1555
    %v1557 = vand.u32 %v1556, 4294901760
    %v1558 = vsub.f32 %v1556, %v1557
    %v1559 = vand.u32 %v1558, 4294901760
    %1560 = vmatpush1.xpose.msra.mxu0 %v1559
    %1561 = vmatprep.subr.mxu0 0.0
    %1562 = vmatpush1.xpose.msra.mxu0 0.0
    %1563 = vmatprep.subr.mxu0 0.0
    %1564 = vmatpush1.xpose.msra.mxu0 0.0
    %1565 = vmatprep.subr.mxu0 0.0
    %1566 = vmatpush1.xpose.msra.mxu0 0.0
    %1567 = vmatprep.subr.mxu0 0.0
    %1568 = vmatpush1.xpose.msra.mxu0 0.0
    %1569 = vmatprep.subr.mxu0 0.0
    %1570 = vmatpush1.xpose.msra.mxu0 0.0
    %1571 = vmatprep.subr.mxu0 0.0
    %1572 = vmatpush1.xpose.msra.mxu0 0.0
    %1573 = vmatprep.subr.mxu0 0.0
    %1574 = vmatpush1.xpose.msra.mxu0 0.0
    %1575 = vmatprep.subr.mxu0 0.0
    %1576 = vmatpush1.xpose.msra.mxu0 0.0
    %1577 = vmatprep.subr.mxu0 0.0
    %1578 = vmatpush1.xpose.msra.mxu0 0.0
    %1579 = vmatprep.subr.mxu0 0.0
    %1580 = vmatpush1.xpose.msra.mxu0 0.0
    %1581 = vmatprep.subr.mxu0 0.0
    %1582 = vmatpush1.xpose.msra.mxu0 0.0
    %1583 = vmatprep.subr.mxu0 0.0
    %1584 = vmatpush1.xpose.msra.mxu0 0.0
    %1585 = vmatprep.subr.mxu0 0.0
    %1586 = vmatpush1.xpose.msra.mxu0 0.0
    %1587 = vmatprep.subr.mxu0 0.0
    %1588 = vmatpush1.xpose.msra.mxu0 0.0
    %1589 = vmatprep.subr.mxu0 0.0
    %1590 = vmatpush1.xpose.msra.mxu0 0.0
    %1591 = vmatprep.subr.mxu0 0.0
    %1592 = vmatpush1.xpose.msra.mxu0 0.0
    %1593 = vmatprep.subr.mxu0 0.0
    %1594 = vmatpush1.xpose.msra.mxu0 0.0
    %1595 = vmatprep.subr.mxu0 0.0
    %1596 = vmatpush1.xpose.msra.mxu0 0.0
    %1597 = vmatprep.subr.mxu0 0.0
    %1598 = vmatpush1.xpose.msra.mxu0 0.0
    %1599 = vmatprep.subr.mxu0 0.0
    %1600 = vmatpush1.xpose.msra.mxu0 0.0
    %1601 = vmatprep.subr.mxu0 0.0
    %1602 = vmatpush1.xpose.msra.mxu0 0.0
    %1603 = vmatprep.subr.mxu0 0.0
    %1604 = vmatpush1.xpose.msra.mxu0 0.0
    %1605 = vmatprep.subr.mxu0 0.0
    %1606 = vmatpush1.xpose.msra.mxu0 0.0
    %1607 = vmatprep.subr.mxu0 0.0
    %1608 = vmatpush1.xpose.msra.mxu0 0.0
    %1609 = vmatprep.subr.mxu0 0.0
    %1610 = vmatpush1.xpose.msra.mxu0 0.0
    %1611 = vmatprep.subr.mxu0 0.0
    %1612 = vmatpush1.xpose.msra.mxu0 0.0
    %1613 = vmatprep.subr.mxu0 0.0
    %1614 = vmatpush1.xpose.msra.mxu0 0.0
    %1615 = vmatprep.subr.mxu0 0.0
    %1616 = vmatpush1.xpose.msra.mxu0 0.0
    %1617 = vmatprep.subr.mxu0 0.0
    %1618 = vmatpush1.xpose.msra.mxu0 0.0
    %1619 = vmatprep.subr.mxu0 0.0
    %1620 = vmatpush1.xpose.msra.mxu0 0.0
    %1621 = vmatprep.subr.mxu0 0.0
    %1622 = vmatpush1.xpose.msra.mxu0 0.0
    %1623 = vmatprep.mubr.f32.mxu0 0.0
    %v1624 = vand.u32 %v1029, 4294901760
    %1625 = vmatmul.mubr.f32.gmra.mrb[0].mxu0 %v1624
    %v1626 = vpop.f32.mrb[0].mxu0
    %v1627 = vadd.f32 %v1551, %v1626
    %v1628 = vpop.f32.mrb[0].mxu0
    %1629 = vdwg.mxu0
    %1630 = vmatprep.subr.mxu0 0.0
    %v1631 = vand.u32 %v96, 4294901760
    %v1632 = vsub.f32 %v96, %v1631
    %1633 = vmatpush1.xpose.msra.mxu0 %v1632
    %1634 = vmatprep.subr.mxu0 0.0
    %1635 = vmatpush1.xpose.msra.mxu0 0.0
    %1636 = vmatprep.subr.mxu0 0.0
    %1637 = vmatpush1.xpose.msra.mxu0 0.0
    %1638 = vmatprep.subr.mxu0 0.0
    %1639 = vmatpush1.xpose.msra.mxu0 0.0
    %1640 = vmatprep.subr.mxu0 0.0
    %1641 = vmatpush1.xpose.msra.mxu0 0.0
    %1642 = vmatprep.subr.mxu0 0.0
    %1643 = vmatpush1.xpose.msra.mxu0 0.0
    %1644 = vmatprep.subr.mxu0 0.0
    %1645 = vmatpush1.xpose.msra.mxu0 0.0
    %1646 = vmatprep.subr.mxu0 0.0
    %1647 = vmatpush1.xpose.msra.mxu0 0.0
    %1648 = vmatprep.subr.mxu0 0.0
    %1649 = vmatpush1.xpose.msra.mxu0 0.0
    %1650 = vmatprep.subr.mxu0 0.0
    %1651 = vmatpush1.xpose.msra.mxu0 0.0
    %1652 = vmatprep.subr.mxu0 0.0
    %1653 = vmatpush1.xpose.msra.mxu0 0.0
    %1654 = vmatprep.subr.mxu0 0.0
    %1655 = vmatpush1.xpose.msra.mxu0 0.0
    %1656 = vmatprep.subr.mxu0 0.0
    %1657 = vmatpush1.xpose.msra.mxu0 0.0
    %1658 = vmatprep.subr.mxu0 0.0
    %1659 = vmatpush1.xpose.msra.mxu0 0.0
    %1660 = vmatprep.subr.mxu0 0.0
    %1661 = vmatpush1.xpose.msra.mxu0 0.0
    %1662 = vmatprep.subr.mxu0 0.0
    %1663 = vmatpush1.xpose.msra.mxu0 0.0
    %1664 = vmatprep.subr.mxu0 0.0
    %1665 = vmatpush1.xpose.msra.mxu0 0.0
    %1666 = vmatprep.subr.mxu0 0.0
    %1667 = vmatpush1.xpose.msra.mxu0 0.0
    %1668 = vmatprep.subr.mxu0 0.0
    %1669 = vmatpush1.xpose.msra.mxu0 0.0
    %1670 = vmatprep.subr.mxu0 0.0
    %1671 = vmatpush1.xpose.msra.mxu0 0.0
    %1672 = vmatprep.subr.mxu0 0.0
    %1673 = vmatpush1.xpose.msra.mxu0 0.0
    %1674 = vmatprep.subr.mxu0 0.0
    %1675 = vmatpush1.xpose.msra.mxu0 0.0
    %1676 = vmatprep.subr.mxu0 0.0
    %1677 = vmatpush1.xpose.msra.mxu0 0.0
    %1678 = vmatprep.subr.mxu0 0.0
    %1679 = vmatpush1.xpose.msra.mxu0 0.0
    %1680 = vmatprep.subr.mxu0 0.0
    %1681 = vmatpush1.xpose.msra.mxu0 0.0
    %1682 = vmatprep.subr.mxu0 0.0
    %1683 = vmatpush1.xpose.msra.mxu0 0.0
    %1684 = vmatprep.subr.mxu0 0.0
    %1685 = vmatpush1.xpose.msra.mxu0 0.0
    %1686 = vmatprep.subr.mxu0 0.0
    %1687 = vmatpush1.xpose.msra.mxu0 0.0
    %1688 = vmatprep.subr.mxu0 0.0
    %1689 = vmatpush1.xpose.msra.mxu0 0.0
    %1690 = vmatprep.subr.mxu0 0.0
    %1691 = vmatpush1.xpose.msra.mxu0 0.0
    %1692 = vmatprep.subr.mxu0 0.0
    %1693 = vmatpush1.xpose.msra.mxu0 0.0
    %1694 = vmatprep.subr.mxu0 0.0
    %1695 = vmatpush1.xpose.msra.mxu0 0.0
    %1696 = vmatprep.mubr.f32.mxu0 0.0
    %v1697 = vand.u32 %v1029, 4294901760
    %v1698 = vsub.f32 %v1029, %v1697
    %1699 = vmatmul.mubr.f32.gmra.mrb[0].mxu0 %v1698
    %v1700 = vpop.f32.mrb[0].mxu0
    %v1701 = vadd.f32 %v1627, %v1700
    %v1702 = vpop.f32.mrb[0].mxu0
    %1703 = vdwg.mxu0
    %1704 = vmatprep.subr.mxu0 0.0
    %v1705 = vand.u32 %v96, 4294901760
    %1706 = vmatpush1.xpose.msra.mxu0 %v1705
    %1707 = vmatprep.subr.mxu0 0.0
    %1708 = vmatpush1.xpose.msra.mxu0 0.0
    %1709 = vmatprep.subr.mxu0 0.0
    %1710 = vmatpush1.xpose.msra.mxu0 0.0
    %1711 = vmatprep.subr.mxu0 0.0
    %1712 = vmatpush1.xpose.msra.mxu0 0.0
    %1713 = vmatprep.subr.mxu0 0.0
    %1714 = vmatpush1.xpose.msra.mxu0 0.0
    %1715 = vmatprep.subr.mxu0 0.0
    %1716 = vmatpush1.xpose.msra.mxu0 0.0
    %1717 = vmatprep.subr.mxu0 0.0
    %1718 = vmatpush1.xpose.msra.mxu0 0.0
    %1719 = vmatprep.subr.mxu0 0.0
    %1720 = vmatpush1.xpose.msra.mxu0 0.0
    %1721 = vmatprep.subr.mxu0 0.0
    %1722 = vmatpush1.xpose.msra.mxu0 0.0
    %1723 = vmatprep.subr.mxu0 0.0
    %1724 = vmatpush1.xpose.msra.mxu0 0.0
    %1725 = vmatprep.subr.mxu0 0.0
    %1726 = vmatpush1.xpose.msra.mxu0 0.0
    %1727 = vmatprep.subr.mxu0 0.0
    %1728 = vmatpush1.xpose.msra.mxu0 0.0
    %1729 = vmatprep.subr.mxu0 0.0
    %1730 = vmatpush1.xpose.msra.mxu0 0.0
    %1731 = vmatprep.subr.mxu0 0.0
    %1732 = vmatpush1.xpose.msra.mxu0 0.0
    %1733 = vmatprep.subr.mxu0 0.0
    %1734 = vmatpush1.xpose.msra.mxu0 0.0
    %1735 = vmatprep.subr.mxu0 0.0
    %1736 = vmatpush1.xpose.msra.mxu0 0.0
    %1737 = vmatprep.subr.mxu0 0.0
    %1738 = vmatpush1.xpose.msra.mxu0 0.0
    %1739 = vmatprep.subr.mxu0 0.0
    %1740 = vmatpush1.xpose.msra.mxu0 0.0
    %1741 = vmatprep.subr.mxu0 0.0
    %1742 = vmatpush1.xpose.msra.mxu0 0.0
    %1743 = vmatprep.subr.mxu0 0.0
    %1744 = vmatpush1.xpose.msra.mxu0 0.0
    %1745 = vmatprep.subr.mxu0 0.0
    %1746 = vmatpush1.xpose.msra.mxu0 0.0
    %1747 = vmatprep.subr.mxu0 0.0
    %1748 = vmatpush1.xpose.msra.mxu0 0.0
    %1749 = vmatprep.subr.mxu0 0.0
    %1750 = vmatpush1.xpose.msra.mxu0 0.0
    %1751 = vmatprep.subr.mxu0 0.0
    %1752 = vmatpush1.xpose.msra.mxu0 0.0
    %1753 = vmatprep.subr.mxu0 0.0
    %1754 = vmatpush1.xpose.msra.mxu0 0.0
    %1755 = vmatprep.subr.mxu0 0.0
    %1756 = vmatpush1.xpose.msra.mxu0 0.0
    %1757 = vmatprep.subr.mxu0 0.0
    %1758 = vmatpush1.xpose.msra.mxu0 0.0
    %1759 = vmatprep.subr.mxu0 0.0
    %1760 = vmatpush1.xpose.msra.mxu0 0.0
    %1761 = vmatprep.subr.mxu0 0.0
    %1762 = vmatpush1.xpose.msra.mxu0 0.0
    %1763 = vmatprep.subr.mxu0 0.0
    %1764 = vmatpush1.xpose.msra.mxu0 0.0
    %1765 = vmatprep.subr.mxu0 0.0
    %1766 = vmatpush1.xpose.msra.mxu0 0.0
    %1767 = vmatprep.subr.mxu0 0.0
    %1768 = vmatpush1.xpose.msra.mxu0 0.0
    %1769 = vmatprep.mubr.f32.mxu0 0.0
    %v1770 = vand.u32 %v1029, 4294901760
    %v1771 = vsub.f32 %v1029, %v1770
    %v1772 = vand.u32 %v1771, 4294901760
    %1773 = vmatmul.mubr.f32.gmra.mrb[0].mxu0 %v1772
    %v1774 = vpop.f32.mrb[0].mxu0
    %v1775 = vadd.f32 %v1701, %v1774
    %v1776 = vpop.f32.mrb[0].mxu0
    %1777 = vdwg.mxu0
    %1778 = vmatprep.subr.mxu0 0.0
    %v1779 = vand.u32 %v96, 4294901760
    %v1780 = vsub.f32 %v96, %v1779
    %v1781 = vand.u32 %v1780, 4294901760
    %1782 = vmatpush1.xpose.msra.mxu0 %v1781
    %1783 = vmatprep.subr.mxu0 0.0
    %1784 = vmatpush1.xpose.msra.mxu0 0.0
    %1785 = vmatprep.subr.mxu0 0.0
    %1786 = vmatpush1.xpose.msra.mxu0 0.0
    %1787 = vmatprep.subr.mxu0 0.0
    %1788 = vmatpush1.xpose.msra.mxu0 0.0
    %1789 = vmatprep.subr.mxu0 0.0
    %1790 = vmatpush1.xpose.msra.mxu0 0.0
    %1791 = vmatprep.subr.mxu0 0.0
    %1792 = vmatpush1.xpose.msra.mxu0 0.0
    %1793 = vmatprep.subr.mxu0 0.0
    %1794 = vmatpush1.xpose.msra.mxu0 0.0
    %1795 = vmatprep.subr.mxu0 0.0
    %1796 = vmatpush1.xpose.msra.mxu0 0.0
    %1797 = vmatprep.subr.mxu0 0.0
    %1798 = vmatpush1.xpose.msra.mxu0 0.0
    %1799 = vmatprep.subr.mxu0 0.0
    %1800 = vmatpush1.xpose.msra.mxu0 0.0
    %1801 = vmatprep.subr.mxu0 0.0
    %1802 = vmatpush1.xpose.msra.mxu0 0.0
    %1803 = vmatprep.subr.mxu0 0.0
    %1804 = vmatpush1.xpose.msra.mxu0 0.0
    %1805 = vmatprep.subr.mxu0 0.0
    %1806 = vmatpush1.xpose.msra.mxu0 0.0
    %1807 = vmatprep.subr.mxu0 0.0
    %1808 = vmatpush1.xpose.msra.mxu0 0.0
    %1809 = vmatprep.subr.mxu0 0.0
    %1810 = vmatpush1.xpose.msra.mxu0 0.0
    %1811 = vmatprep.subr.mxu0 0.0
    %1812 = vmatpush1.xpose.msra.mxu0 0.0
    %1813 = vmatprep.subr.mxu0 0.0
    %1814 = vmatpush1.xpose.msra.mxu0 0.0
    %1815 = vmatprep.subr.mxu0 0.0
    %1816 = vmatpush1.xpose.msra.mxu0 0.0
    %1817 = vmatprep.subr.mxu0 0.0
    %1818 = vmatpush1.xpose.msra.mxu0 0.0
    %1819 = vmatprep.subr.mxu0 0.0
    %1820 = vmatpush1.xpose.msra.mxu0 0.0
    %1821 = vmatprep.subr.mxu0 0.0
    %1822 = vmatpush1.xpose.msra.mxu0 0.0
    %1823 = vmatprep.subr.mxu0 0.0
    %1824 = vmatpush1.xpose.msra.mxu0 0.0
    %1825 = vmatprep.subr.mxu0 0.0
    %1826 = vmatpush1.xpose.msra.mxu0 0.0
    %1827 = vmatprep.subr.mxu0 0.0
    %1828 = vmatpush1.xpose.msra.mxu0 0.0
    %1829 = vmatprep.subr.mxu0 0.0
    %1830 = vmatpush1.xpose.msra.mxu0 0.0
    %1831 = vmatprep.subr.mxu0 0.0
    %1832 = vmatpush1.xpose.msra.mxu0 0.0
    %1833 = vmatprep.subr.mxu0 0.0
    %1834 = vmatpush1.xpose.msra.mxu0 0.0
    %1835 = vmatprep.subr.mxu0 0.0
    %1836 = vmatpush1.xpose.msra.mxu0 0.0
    %1837 = vmatprep.subr.mxu0 0.0
    %1838 = vmatpush1.xpose.msra.mxu0 0.0
    %1839 = vmatprep.subr.mxu0 0.0
    %1840 = vmatpush1.xpose.msra.mxu0 0.0
    %1841 = vmatprep.subr.mxu0 0.0
    %1842 = vmatpush1.xpose.msra.mxu0 0.0
    %1843 = vmatprep.subr.mxu0 0.0
    %1844 = vmatpush1.xpose.msra.mxu0 0.0
    %1845 = vmatprep.mubr.f32.mxu0 0.0
    %v1846 = vand.u32 %v1029, 4294901760
    %1847 = vmatmul.mubr.f32.gmra.mrb[0].mxu0 %v1846
    %v1848 = vpop.f32.mrb[0].mxu0
    %v1849 = vadd.f32 %v1775, %v1848
    %v1850 = vpop.f32.mrb[0].mxu0
    %1851 = vdwg.mxu0
    %1852 = vmatprep.subr.mxu0 0.0
    %v1853 = vand.u32 %v96, 4294901760
    %1854 = vmatpush1.xpose.msra.mxu0 %v1853
    %1855 = vmatprep.subr.mxu0 0.0
    %1856 = vmatpush1.xpose.msra.mxu0 0.0
    %1857 = vmatprep.subr.mxu0 0.0
    %1858 = vmatpush1.xpose.msra.mxu0 0.0
    %1859 = vmatprep.subr.mxu0 0.0
    %1860 = vmatpush1.xpose.msra.mxu0 0.0
    %1861 = vmatprep.subr.mxu0 0.0
    %1862 = vmatpush1.xpose.msra.mxu0 0.0
    %1863 = vmatprep.subr.mxu0 0.0
    %1864 = vmatpush1.xpose.msra.mxu0 0.0
    %1865 = vmatprep.subr.mxu0 0.0
    %1866 = vmatpush1.xpose.msra.mxu0 0.0
    %1867 = vmatprep.subr.mxu0 0.0
    %1868 = vmatpush1.xpose.msra.mxu0 0.0
    %1869 = vmatprep.subr.mxu0 0.0
    %1870 = vmatpush1.xpose.msra.mxu0 0.0
    %1871 = vmatprep.subr.mxu0 0.0
    %1872 = vmatpush1.xpose.msra.mxu0 0.0
    %1873 = vmatprep.subr.mxu0 0.0
    %1874 = vmatpush1.xpose.msra.mxu0 0.0
    %1875 = vmatprep.subr.mxu0 0.0
    %1876 = vmatpush1.xpose.msra.mxu0 0.0
    %1877 = vmatprep.subr.mxu0 0.0
    %1878 = vmatpush1.xpose.msra.mxu0 0.0
    %1879 = vmatprep.subr.mxu0 0.0
    %1880 = vmatpush1.xpose.msra.mxu0 0.0
    %1881 = vmatprep.subr.mxu0 0.0
    %1882 = vmatpush1.xpose.msra.mxu0 0.0
    %1883 = vmatprep.subr.mxu0 0.0
    %1884 = vmatpush1.xpose.msra.mxu0 0.0
    %1885 = vmatprep.subr.mxu0 0.0
    %1886 = vmatpush1.xpose.msra.mxu0 0.0
    %1887 = vmatprep.subr.mxu0 0.0
    %1888 = vmatpush1.xpose.msra.mxu0 0.0
    %1889 = vmatprep.subr.mxu0 0.0
    %1890 = vmatpush1.xpose.msra.mxu0 0.0
    %1891 = vmatprep.subr.mxu0 0.0
    %1892 = vmatpush1.xpose.msra.mxu0 0.0
    %1893 = vmatprep.subr.mxu0 0.0
    %1894 = vmatpush1.xpose.msra.mxu0 0.0
    %1895 = vmatprep.subr.mxu0 0.0
    %1896 = vmatpush1.xpose.msra.mxu0 0.0
    %1897 = vmatprep.subr.mxu0 0.0
    %1898 = vmatpush1.xpose.msra.mxu0 0.0
    %1899 = vmatprep.subr.mxu0 0.0
    %1900 = vmatpush1.xpose.msra.mxu0 0.0
    %1901 = vmatprep.subr.mxu0 0.0
    %1902 = vmatpush1.xpose.msra.mxu0 0.0
    %1903 = vmatprep.subr.mxu0 0.0
    %1904 = vmatpush1.xpose.msra.mxu0 0.0
    %1905 = vmatprep.subr.mxu0 0.0
    %1906 = vmatpush1.xpose.msra.mxu0 0.0
    %1907 = vmatprep.subr.mxu0 0.0
    %1908 = vmatpush1.xpose.msra.mxu0 0.0
    %1909 = vmatprep.subr.mxu0 0.0
    %1910 = vmatpush1.xpose.msra.mxu0 0.0
    %1911 = vmatprep.subr.mxu0 0.0
    %1912 = vmatpush1.xpose.msra.mxu0 0.0
    %1913 = vmatprep.subr.mxu0 0.0
    %1914 = vmatpush1.xpose.msra.mxu0 0.0
    %1915 = vmatprep.subr.mxu0 0.0
    %1916 = vmatpush1.xpose.msra.mxu0 0.0
    %1917 = vmatprep.mubr.f32.mxu0 0.0
    %v1918 = vand.u32 %v1029, 4294901760
    %1919 = vmatmul.mubr.f32.gmra.mrb[0].mxu0 %v1918
    %v1920 = vpop.f32.mrb[0].mxu0
    %v1921 = vadd.f32 %v1849, %v1920
    %v1922 = vpop.f32.mrb[0].mxu0
    %1923 = vdwg.mxu0
    %v1924 = vmul.f32 %v1921, 2.0
    %v1925 = vsel %vm89, -1e+30, %v1477
    %v1926 = vld [vmem:[#allocation4] sm:$0xff]
    %v1927 = vmax.f32 %v1925, %v1924
    %v1928 = vsel %vm998, %v1927, -inf
    %1929 = vmax.xlane.f32.xlu0 %v1928
    %v1930 = vpop.xlane.xlu0 %1929
    %v1931 = vmax.f32 %v1926, %v1930
    %1933 = vset.pattern.permute.xlu0 0
    %1934 = vperm.xlu0 %1933, %v1931
    %v1935 = vpop.permute.xlu0 %1934
    %v1937 = vsub.f32 %v1925, %v1935
    %v1938 = vmul.f32 %v1937, 1.442695
    %v1939 = vpow.pop %v1938
    %v1940 = vsub.f32 %v1924, %v1935
    %v1941 = vmul.f32 %v1940, 1.442695
    %v1942 = vpow.pop %v1941
    %v1943 = vadd.f32 %v1939, %v1942
    %v1944 = vsub.f32 %v1926, %v1931
    %v1945 = vmul.f32 %v1944, 1.442695
    %v1946 = vpow.pop %v1945
    %v1947 = vld [vmem:[#allocation5] sm:$0xff]
    %v1948 = vmul.f32 %v1946, %v1947
    %v1949 = vsel %vm998, %v1943, 0.0
    %1950 = vadd.xlane.f32.xlu0 %v1949
    %v1951 = vpop.xlane.xlu0 %1950
    %v1952 = vadd.f32 %v1948, %v1951
    %1953 = vst.msk [vmem:[#allocation5] sm:$0xff] %vm1024, %v1952
    %1954 = vst.msk [vmem:[#allocation4] sm:$0xff] %vm1024, %v1931
    // Predicated region
    $region38: #{tpu_custom_call.1} parent=1 // pred_check
      %p1955 = pneg %p68
    $region39: #{tpu_custom_call.1} parent=1 // pred_check_branch
      %1957 = sbr.rel (%p1955) target = $region41
    $region40: #{tpu_custom_call.1} parent=1 // pred_region
      %v1958 = vld [vmem:[#allocation6] sm:$0xff]
      %v1959 = vld [vmem:[#allocation9] sm:$0xff]
      %v1960 = vmul.f32 %v1958, %v1959
      %v1961 = vsel %vm91, %v1960, 0.0
      %1962 = vadd.xlane.f32.xlu0 %v1961
      %v1963 = vpop.xlane.xlu0 %1962
      %v1964 = vmul.f32 %v1963, 2.0
      %v1965 = vld [vmem:[#allocation2] sm:$0xff]
      %v1966 = vld [vmem:[#allocation3] sm:$0xff]
      %v1967 = vlog2.pop %v1966
      %v1968 = vmul.f32 %v1967, 0.6931472
      %v1969 = vadd.f32 %v1965, %v1968
      %v1970 = vsub.f32 %v1969, %v1964
      %1971 = vst.msk [vmem:[#allocation14] sm:$0xff] %vm1024, %v1970
      %v1972 = vld [vmem:[#allocation4] sm:$0xff]
      %v1973 = vld [vmem:[#allocation5] sm:$0xff]
      %v1974 = vlog2.pop %v1973
      %v1975 = vmul.f32 %v1974, 0.6931472
      %v1976 = vadd.f32 %v1972, %v1975
      %v1977 = vsub.f32 %v1976, %v1964
      %1978 = vst.msk [vmem:[#allocation15] sm:$0xff] %vm1024, %v1977
    $region41: #{tpu_custom_call.1} parent=1 // pred_fallthru
      _
    // Predicated region
    $region42: #{tpu_custom_call.1} parent=1 // pred_check
      _
    $region43: #{tpu_custom_call.1} parent=1 // pred_check_branch
      %1980 = sbr.rel (0) target = $region45
    $region44: #{tpu_custom_call.1} parent=1 // pred_region
      %s1982 = ssub.s32 128, 128
      %1983 = vsyncadd [#allocation8], %s1982
      %s1985 = sshll.u32 [#allocation14], 4
      %s1986 = int_to_ptr.vmem [resolvable:$true] %s1985
      %1988 = dma.vmem_to_hbm [thread:$0]  %s1986, 128, %s4, [#allocation8]
    $region45: #{tpu_custom_call.1} parent=1 // pred_fallthru
      _
    // Predicated region
    $region46: #{tpu_custom_call.1} parent=1 // pred_check
      _
    $region47: #{tpu_custom_call.1} parent=1 // pred_check_branch
      %1990 = sbr.rel (0) target = $region49
    $region48: #{tpu_custom_call.1} parent=1 // pred_region
      %s1992 = ssub.s32 128, 128
      %1993 = vsyncadd [#allocation16], %s1992
      %s1995 = sshll.u32 [#allocation15], 4
      %s1996 = int_to_ptr.vmem [resolvable:$true] %s1995
      %1998 = dma.vmem_to_hbm [thread:$0]  %s1996, 128, %s5, [#allocation16]
    $region49: #{tpu_custom_call.1} parent=1 // pred_fallthru
      _
    // Predicated region
    $region50: #{tpu_custom_call.1} parent=1 // pred_check
      _
    $region51: #{tpu_custom_call.1} parent=1 // pred_check_branch
      %2000 = sbr.rel (0) target = $region53
    $region52: #{tpu_custom_call.1} parent=1 // pred_region
      %2001 = dma.done [#allocation8], 128
    $region53: #{tpu_custom_call.1} parent=1 // pred_fallthru
      _
    // Predicated region
    $region54: #{tpu_custom_call.1} parent=1 // pred_check
      _
    $region55: #{tpu_custom_call.1} parent=1 // pred_check_branch
      %2003 = sbr.rel (0) target = $region57
    $region56: #{tpu_custom_call.1} parent=1 // pred_region
      %2004 = dma.done [#allocation16], 128
    $region57: #{tpu_custom_call.1} parent=1 // pred_fallthru
      _
    %2005 = vsyncpa [#allocation7], 1
    %2006 = vsyncpa [#allocation10], 1
    %2007 = vsyncpa [#allocation13], 1
    %2008 = vsyncpa [#allocation8], 1
    %2009 = vsyncpa [#allocation16], 1

</llo_original>
